<compile_context>
chip_gen: v5e
topology: v5e:2x2
jax: 0.10.0
libtpu: 0.0.40
codegen_flags: <defaults>
</compile_context>

<pallas_src>
import functools

import jax
import jax.numpy as jnp
from jax.experimental import pallas as pl
from jax.experimental.pallas import tpu as pltpu


def _round_up(x, m):
    return ((x + m - 1) // m) * m


def _vmem_capacity_bytes():
    """Physical VMEM per TensorCore; conservative 64 MiB (v7x) if unknown."""
    try:
        info = pltpu.get_tpu_info()
        cap = getattr(info, "vmem_capacity_bytes", None)
        if cap:
            return int(cap)
    except Exception:
        pass
    return 64 * 2**20


# --------------------------------------------------------------------------
# Kernels
# --------------------------------------------------------------------------

def _ffn_resident_kernel(x_ref, w1_ref, b1_ref, w2_ref, b2_ref, o_ref, *,
                         eps, mxu_dtype):
    """Whole W1/W2 resident in VMEM; grid is (row_tiles,)."""
    # LayerNorm (gamma/beta already folded into W1/b1): single-pass stats.
    x = x_ref[...].astype(jnp.float32)                       # (tm, dim)
    mean = jnp.mean(x, axis=-1, keepdims=True)
    ex2 = jnp.mean(x * x, axis=-1, keepdims=True)
    var = jnp.maximum(ex2 - mean * mean, 0.0)                # E[x^2] - E[x]^2
    xn = ((x - mean) * jax.lax.rsqrt(var + eps)).astype(mxu_dtype)

    # Linear(dim -> hidden): bf16 MXU operands, f32 accumulation.
    h = jnp.dot(xn, w1_ref[...], preferred_element_type=jnp.float32)
    h = h + b1_ref[...].astype(jnp.float32)                  # (tm, hidden)
    h = h * jax.nn.sigmoid(h)                                # SiLU (EUP slot)
    # Dropout(p=0.0) -> identity

    # Linear(hidden -> dim)
    y = jnp.dot(h.astype(mxu_dtype), w2_ref[...],
                preferred_element_type=jnp.float32)
    o_ref[...] = (y + b2_ref[...].astype(jnp.float32)).astype(o_ref.dtype)
    # Dropout(p=0.0) -> identity


def _ffn_hidden_tiled_kernel(x_ref, w1_ref, b1_ref, w2_ref, b2_ref, o_ref,
                             xn_sc, acc_sc, *, eps, mxu_dtype):
    """Fallback for large dim*hidden: grid is (row_tiles, hidden_tiles).

    The hidden axis is a reduction axis ("arbitrary"): W1's N and W2's K are
    tiled and pipelined, the second matmul accumulates into an f32 scratch.
    """
    hstep = pl.program_id(1)

    @pl.when(hstep == 0)
    def _():
        x = x_ref[...].astype(jnp.float32)
        mean = jnp.mean(x, axis=-1, keepdims=True)
        ex2 = jnp.mean(x * x, axis=-1, keepdims=True)
        var = jnp.maximum(ex2 - mean * mean, 0.0)
        xn_sc[...] = ((x - mean) * jax.lax.rsqrt(var + eps)).astype(mxu_dtype)
        acc_sc[...] = jnp.zeros_like(acc_sc)

    h = jnp.dot(xn_sc[...], w1_ref[...], preferred_element_type=jnp.float32)
    h = h + b1_ref[...].astype(jnp.float32)                  # (tm, h_tile)
    h = h * jax.nn.sigmoid(h)
    acc_sc[...] += jnp.dot(h.astype(mxu_dtype), w2_ref[...],
                           preferred_element_type=jnp.float32)

    @pl.when(hstep == pl.num_programs(1) - 1)
    def _():
        o_ref[...] = (acc_sc[...]
                      + b2_ref[...].astype(jnp.float32)).astype(o_ref.dtype)


# --------------------------------------------------------------------------
# Parameter preparation (done ONCE, not per forward call)
# --------------------------------------------------------------------------

def init_raw_params(key, dim, hidden_dim, dtype=jnp.float32):
    """Deterministic synthetic init mirroring the torch module's parameters."""
    k1, k2, k3, k4 = jax.random.split(key, 4)
    gamma = jnp.ones((dim,), dtype)                         # LayerNorm.weight
    beta = jnp.zeros((dim,), dtype)                         # LayerNorm.bias
    lim1 = 1.0 / (dim ** 0.5)
    lim2 = 1.0 / (hidden_dim ** 0.5)
    w1 = jax.random.uniform(k1, (dim, hidden_dim), dtype, -lim1, lim1)
    b1 = jax.random.uniform(k2, (hidden_dim,), dtype, -lim1, lim1)
    w2 = jax.random.uniform(k3, (hidden_dim, dim), dtype, -lim2, lim2)
    b2 = jax.random.uniform(k4, (dim,), dtype, -lim2, lim2)
    return gamma, beta, w1, b1, w2, b2


def prepare_params(raw_params, mxu_dtype=jnp.bfloat16):
    """Fold LN affine into Linear1 (in f32) and cast weights to MXU dtype once.

    (xn * gamma + beta) @ W1 + b1  ==  xn @ (diag(gamma) @ W1) + (beta @ W1 + b1)
    """
    gamma, beta, w1, b1, w2, b2 = raw_params
    gamma_f = gamma.astype(jnp.float32)
    beta_f = beta.astype(jnp.float32)
    w1_f = w1.astype(jnp.float32)
    w1_fold = w1_f * gamma_f[:, None]
    b1_fold = b1.astype(jnp.float32) + beta_f @ w1_f
    return (w1_fold.astype(mxu_dtype),
            b1_fold.reshape(1, -1).astype(jnp.float32),
            w2.astype(mxu_dtype),
            b2.reshape(1, -1).astype(jnp.float32))
    # TODO(synk): on v7x, fp8 weights (with f32 accumulation) would halve
    # weight DMA/VMEM again if the model tolerates it.


# --------------------------------------------------------------------------
# Forward wrapper
# --------------------------------------------------------------------------

def feed_forward(x, params, *, eps=1e-5, row_tile=None, out_dtype=None,
                 force_hidden_tile=None):
    """x: (..., dim) -> (..., dim); matches torch FeedForward.forward (eval)."""
    w1, b1, w2, b2 = params
    dim, hidden = w1.shape
    # 128 is the hard lane requirement; 256-multiples are preferred on
    # v6e/v7x (2x256^2 MXU) -- pad the model's feature dims outside if needed.
    assert dim % 128 == 0 and hidden % 128 == 0, (
        "dim / hidden_dim must be multiples of 128 (TPU lane width)")

    mxu_dtype = w1.dtype
    out_dtype = x.dtype if out_dtype is None else out_dtype

    lead_shape = x.shape[:-1]
    x2 = x.reshape(-1, dim)
    rows = x2.shape[0]

    x_b = jnp.dtype(x.dtype).itemsize
    o_b = jnp.dtype(out_dtype).itemsize
    w_b = jnp.dtype(mxu_dtype).itemsize

    # ---- generation-aware VMEM budget and row-tile defaults --------------
    cap = _vmem_capacity_bytes()
    vmem_limit = max(32 * 2**20, min(int(cap * 0.75), 100 * 2**20))
    if row_tile is None:
        row_tile = 512 if cap >= 96 * 2**20 else 256

    # dtype-aware minimum tile: full (sublane, lane) native tiles.
    min_tile = {4: 8, 2: 16, 1: 32}.get(x_b, 8)
    # keep >= ~8 grid steps (>= ~4 per TC after megacore split) when possible.
    row_tile = min(row_tile, max(min_tile, _round_up(-(-rows // 8), min_tile)))
    row_tile = _round_up(row_tile, min_tile)

    def resident_bytes(rt):
        tiles = 2 * rt * dim * (x_b + o_b)                 # x/out double-buffered
        weights = 2 * dim * hidden * w_b                   # W1 + W2, single copy
        biases = (hidden + dim) * 4
        interm = rt * (hidden + dim) * 4 + rt * dim * w_b  # h, y (f32), xn
        return tiles + weights + biases + interm

    def tiled_bytes(rt, ht):
        tiles = 2 * rt * dim * (x_b + o_b)
        wblocks = 2 * 2 * dim * ht * w_b                   # W1/W2 blocks, 2-deep
        biases = 2 * ht * 4 + dim * 4
        scratch = rt * dim * w_b + rt * dim * 4            # xn_sc + acc_sc
        interm = rt * ht * 4
        return tiles + wblocks + biases + scratch + interm

    # ---- choose resident vs hidden-tiled plan -----------------------------
    h_tile = None
    if force_hidden_tile is not None:
        h_tile = int(force_hidden_tile)
        assert hidden % h_tile == 0 and h_tile % 128 == 0
    else:
        rt = row_tile
        while not resident_bytes(rt) <= vmem_limit and rt > min_tile:
            rt = max(min_tile, _round_up(rt // 2, min_tile))
        if resident_bytes(rt) <= vmem_limit:
            row_tile = rt
        else:
            # Weights can't be whole-resident: tile the hidden dimension.
            row_tile = rt
            h_tile = hidden
            while (tiled_bytes(row_tile, h_tile) > vmem_limit
                   and h_tile > 128 and (h_tile // 2) % 128 == 0):
                h_tile //= 2

    rows_p = _round_up(rows, row_tile)
    if rows_p != rows:
        # Zero-padded rows give var=0 -> rsqrt(eps): finite throwaway output,
        # sliced off below.
        x2 = jnp.pad(x2, ((0, rows_p - rows), (0, 0)))

    cost = pl.CostEstimate(
        flops=4 * rows_p * dim * hidden,                   # two matmuls
        transcendentals=rows_p * hidden,                   # sigmoid
        bytes_accessed=(rows_p * dim * (x_b + o_b)
                        + 2 * dim * hidden * w_b
                        + (hidden + dim) * 4),
    )

    vmem_full = pl.BlockSpec(memory_space=pltpu.MemorySpace.VMEM)

    if h_tile is None:
        # ---- resident-weight path ----------------------------------------
        out = pl.pallas_call(
            functools.partial(_ffn_resident_kernel, eps=eps,
                              mxu_dtype=mxu_dtype),
            out_shape=jax.ShapeDtypeStruct((rows_p, dim), out_dtype),
            grid=(rows_p // row_tile,),
            in_specs=[
                pl.BlockSpec((row_tile, dim), lambda i: (i, 0)),  # x tile
                vmem_full,   # W1 (gamma folded in)
                vmem_full,   # b1 (beta @ W1 folded in)
                vmem_full,   # W2
                vmem_full,   # b2
            ],
            out_specs=pl.BlockSpec((row_tile, dim), lambda i: (i, 0)),
            compiler_params=pltpu.CompilerParams(
                dimension_semantics=("parallel",),
                vmem_limit_bytes=vmem_limit),
            cost_estimate=cost,
        )(x2, w1, b1, w2, b2)
    else:
        # ---- hidden-tiled fallback path (large dim*hidden) -----------------
        out = pl.pallas_call(
            functools.partial(_ffn_hidden_tiled_kernel, eps=eps,
                              mxu_dtype=mxu_dtype),
            out_shape=jax.ShapeDtypeStruct((rows_p, dim), out_dtype),
            grid=(rows_p // row_tile, hidden // h_tile),
            in_specs=[
                pl.BlockSpec((row_tile, dim), lambda i, h: (i, 0)),   # x tile
                pl.BlockSpec((dim, h_tile), lambda i, h: (0, h)),     # W1 block
                pl.BlockSpec((1, h_tile), lambda i, h: (0, h)),       # b1 block
                pl.BlockSpec((h_tile, dim), lambda i, h: (h, 0)),     # W2 block
                pl.BlockSpec((1, dim), lambda i, h: (0, 0)),          # b2
            ],
            out_specs=pl.BlockSpec((row_tile, dim), lambda i, h: (i, 0)),
            scratch_shapes=[
                pltpu.VMEM((row_tile, dim), mxu_dtype),    # normalized x
                pltpu.VMEM((row_tile, dim), jnp.float32),  # output accumulator
            ],
            compiler_params=pltpu.CompilerParams(
                dimension_semantics=("parallel", "arbitrary"),
                vmem_limit_bytes=vmem_limit),
            cost_estimate=cost,
        )(x2, w1, b1, w2, b2)

    if rows_p != rows:
        out = out[:rows]
    return out.reshape(*lead_shape, dim)


# --------------------------------------------------------------------------
# Reference & demo
# --------------------------------------------------------------------------

def _reference(x, raw_params, eps=1e-5):
    """Pure-f32 reference (HIGHEST precision matmuls) matching torch semantics."""
    gamma, beta, w1, b1, w2, b2 = raw_params
    xf = x.astype(jnp.float32)
    mean = jnp.mean(xf, axis=-1, keepdims=True)
    var = jnp.mean((xf - mean) ** 2, axis=-1, keepdims=True)
    xn = (xf - mean) / jnp.sqrt(var + eps) * gamma + beta
    h = jnp.dot(xn, w1.astype(jnp.float32),
                precision=jax.lax.Precision.HIGHEST) + b1
    h = h * jax.nn.sigmoid(h)
    y = jnp.dot(h, w2.astype(jnp.float32),
                precision=jax.lax.Precision.HIGHEST) + b2
    return y.astype(x.dtype)


if __name__ == "__main__":
    # Small transformer-MLP shapes; feature dims 256-aligned (fills the
    # 2x256^2 MXU on v6e/v7x).
    batch, seq, dim, hidden_dim = 2, 256, 256, 512
    key = jax.random.PRNGKey(0)
    kx, kp = jax.random.split(key)

    x = jax.random.normal(kx, (batch, seq, dim), jnp.float32)
    raw = init_raw_params(kp, dim, hidden_dim)
    params = prepare_params(raw)          # fold LN affine + cast to bf16 ONCE

    y_ref = _reference(x, raw)

    # Primary (resident-weight) path.
    y = jax.block_until_ready(feed_forward(x, params))
    assert y.shape == x.shape
    assert jnp.allclose(y, y_ref, atol=3e-2, rtol=3e-2), \
        "resident path mismatch vs reference"

    # Exercise the hidden-tiled fallback path (used when weights would not
    # fit whole-resident in VMEM) and check it too.
    y_t = jax.block_until_ready(feed_forward(x, params, force_hidden_tile=256))
    assert jnp.allclose(y_t, y_ref, atol=3e-2, rtol=3e-2), \
        "hidden-tiled path mismatch vs reference"

    print("KERNEL_OK")
</pallas_src>

<mosaic_0001>
module attributes {stable_mosaic.version = 11 : i64} {
  func.func @_ffn_resident_kernel(%arg0: i32, %arg1: memref<64x256xf32, #tpu.memory_space<vmem>>, %arg2: memref<256x512xbf16, #tpu.memory_space<vmem>>, %arg3: memref<1x512xf32, #tpu.memory_space<vmem>>, %arg4: memref<512x256xbf16, #tpu.memory_space<vmem>>, %arg5: memref<1x256xf32, #tpu.memory_space<vmem>>, %arg6: memref<64x256xf32, #tpu.memory_space<vmem>>) attributes {dimension_semantics = [#tpu.dimension_semantics<parallel>], iteration_bounds = array<i64: 8>, scalar_prefetch = 0 : i64, scratch_operands = 0 : i64, tpu.core_type = #tpu.core_type<tc>, window_params = [{transform_indices = @transform_0, window_bounds = array<i64: 64, 256>}, {pipeline_mode = #tpu.pipeline_mode<synchronous>, transform_indices = @transform_1, window_bounds = array<i64: 256, 512>}, {pipeline_mode = #tpu.pipeline_mode<synchronous>, transform_indices = @transform_2, window_bounds = array<i64: 1, 512>}, {pipeline_mode = #tpu.pipeline_mode<synchronous>, transform_indices = @transform_3, window_bounds = array<i64: 512, 256>}, {pipeline_mode = #tpu.pipeline_mode<synchronous>, transform_indices = @transform_4, window_bounds = array<i64: 1, 256>}, {transform_indices = @transform_5, window_bounds = array<i64: 64, 256>}]} {
    %c0 = arith.constant 0 : index
    %c0_0 = arith.constant 0 : index
    %0 = vector.load %arg1[%c0, %c0_0] : memref<64x256xf32, #tpu.memory_space<vmem>>, vector<64x256xf32>
    %cst = arith.constant dense<0.000000e+00> : vector<64xf32>
    %1 = vector.multi_reduction <add>, %0, %cst [1] : vector<64x256xf32> to vector<64xf32>
    %2 = vector.shape_cast %1 : vector<64xf32> to vector<64x1xf32>
    %cst_1 = arith.constant 2.560000e+02 : f32
    %3 = vector.broadcast %cst_1 : f32 to vector<64x1xf32>
    %4 = arith.divf %2, %3 : vector<64x1xf32>
    %5 = arith.mulf %0, %0 : vector<64x256xf32>
    %cst_2 = arith.constant dense<0.000000e+00> : vector<64xf32>
    %6 = vector.multi_reduction <add>, %5, %cst_2 [1] : vector<64x256xf32> to vector<64xf32>
    %7 = vector.shape_cast %6 : vector<64xf32> to vector<64x1xf32>
    %cst_3 = arith.constant 2.560000e+02 : f32
    %8 = vector.broadcast %cst_3 : f32 to vector<64x1xf32>
    %9 = arith.divf %7, %8 : vector<64x1xf32>
    %10 = arith.mulf %4, %4 : vector<64x1xf32>
    %11 = arith.subf %9, %10 : vector<64x1xf32>
    %cst_4 = arith.constant 0.000000e+00 : f32
    %12 = vector.broadcast %cst_4 : f32 to vector<64x1xf32>
    %13 = arith.maximumf %11, %12 : vector<64x1xf32>
    %14 = vector.broadcast %4 : vector<64x1xf32> to vector<64x256xf32>
    %15 = arith.subf %0, %14 : vector<64x256xf32>
    %cst_5 = arith.constant 9.99999974E-6 : f32
    %16 = vector.broadcast %cst_5 : f32 to vector<64x1xf32>
    %17 = arith.addf %13, %16 : vector<64x1xf32>
    %18 = math.rsqrt %17 : vector<64x1xf32>
    %19 = vector.broadcast %18 : vector<64x1xf32> to vector<64x256xf32>
    %20 = arith.mulf %15, %19 : vector<64x256xf32>
    %21 = arith.truncf %20 : vector<64x256xf32> to vector<64x256xbf16>
    %c0_6 = arith.constant 0 : index
    %c0_7 = arith.constant 0 : index
    %22 = vector.load %arg2[%c0_6, %c0_7] : memref<256x512xbf16, #tpu.memory_space<vmem>>, vector<256x512xbf16>
    %cst_8 = arith.constant dense<0.000000e+00> : vector<64x512xf32>
    %23 = tpu.matmul %21, %22, %cst_8 {dimension_numbers = #tpu.dot_dimension_numbers<[1], [0], [0], [1], [0, 0, 1, 1], [], []>} : vector<64x256xbf16>, vector<256x512xbf16>, vector<64x512xf32> -> vector<64x512xf32>
    %c0_9 = arith.constant 0 : index
    %c0_10 = arith.constant 0 : index
    %24 = vector.load %arg3[%c0_9, %c0_10] : memref<1x512xf32, #tpu.memory_space<vmem>>, vector<1x512xf32>
    %25 = vector.broadcast %24 : vector<1x512xf32> to vector<64x512xf32>
    %26 = arith.addf %23, %25 : vector<64x512xf32>
    %27 = arith.negf %26 : vector<64x512xf32>
    %28 = math.exp %27 : vector<64x512xf32>
    %cst_11 = arith.constant 1.000000e+00 : f32
    %29 = vector.broadcast %cst_11 : f32 to vector<64x512xf32>
    %30 = arith.addf %29, %28 : vector<64x512xf32>
    %31 = arith.divf %29, %30 : vector<64x512xf32>
    %32 = arith.mulf %26, %31 : vector<64x512xf32>
    %33 = arith.truncf %32 : vector<64x512xf32> to vector<64x512xbf16>
    %c0_12 = arith.constant 0 : index
    %c0_13 = arith.constant 0 : index
    %34 = vector.load %arg4[%c0_12, %c0_13] : memref<512x256xbf16, #tpu.memory_space<vmem>>, vector<512x256xbf16>
    %cst_14 = arith.constant dense<0.000000e+00> : vector<64x256xf32>
    %35 = tpu.matmul %33, %34, %cst_14 {dimension_numbers = #tpu.dot_dimension_numbers<[1], [0], [0], [1], [0, 0, 1, 1], [], []>} : vector<64x512xbf16>, vector<512x256xbf16>, vector<64x256xf32> -> vector<64x256xf32>
    %c0_15 = arith.constant 0 : index
    %c0_16 = arith.constant 0 : index
    %36 = vector.load %arg5[%c0_15, %c0_16] : memref<1x256xf32, #tpu.memory_space<vmem>>, vector<1x256xf32>
    %37 = vector.broadcast %36 : vector<1x256xf32> to vector<64x256xf32>
    %38 = arith.addf %35, %37 : vector<64x256xf32>
    %c0_17 = arith.constant 0 : index
    %c0_18 = arith.constant 0 : index
    %39 = vector.load %arg6[%c0_17, %c0_18] : memref<64x256xf32, #tpu.memory_space<vmem>>, vector<64x256xf32>
    tpu.vector_store %arg6[%c0_17, %c0_18], %38 {strides = array<i32>} : memref<64x256xf32, #tpu.memory_space<vmem>>, vector<64x256xf32>,
    return
  }
  func.func @transform_0(%arg0: i32) -> (i32, i32) {
    %c0_i32 = arith.constant 0 : i32
    %c0_i32_0 = arith.constant 0 : i32
    return %arg0, %c0_i32 : i32, i32
  }
  func.func @transform_1(%arg0: i32) -> (i32, i32) {
    %c0_i32 = arith.constant 0 : i32
    %c0_i32_0 = arith.constant 0 : i32
    %c0_i32_1 = arith.constant 0 : i32
    return %c0_i32, %c0_i32_0 : i32, i32
  }
  func.func @transform_2(%arg0: i32) -> (i32, i32) {
    %c0_i32 = arith.constant 0 : i32
    %c0_i32_0 = arith.constant 0 : i32
    %c0_i32_1 = arith.constant 0 : i32
    return %c0_i32, %c0_i32_0 : i32, i32
  }
  func.func @transform_3(%arg0: i32) -> (i32, i32) {
    %c0_i32 = arith.constant 0 : i32
    %c0_i32_0 = arith.constant 0 : i32
    %c0_i32_1 = arith.constant 0 : i32
    return %c0_i32, %c0_i32_0 : i32, i32
  }
  func.func @transform_4(%arg0: i32) -> (i32, i32) {
    %c0_i32 = arith.constant 0 : i32
    %c0_i32_0 = arith.constant 0 : i32
    %c0_i32_1 = arith.constant 0 : i32
    return %c0_i32, %c0_i32_0 : i32, i32
  }
  func.func @transform_5(%arg0: i32) -> (i32, i32) {
    %c0_i32 = arith.constant 0 : i32
    %c0_i32_0 = arith.constant 0 : i32
    return %arg0, %c0_i32 : i32, i32
  }
}

</mosaic_0001>

<llo_original>
// kernel: tpu_custom_call.1
$region0: #{tpu_custom_call.1}
  #allocation0 [shape = 'u32[]', space=smem, size = 0x4, offset = 0x4, fixed_abs, tag = 'smem constant byte address 0x4 - core index']
  #allocation1 [shape = 'u32[72,128]{1,0:T(1,128)}', space=vmem, size = 0x9000, scoped, tag = 'internal scratch']
  %s0 = inlined_call_operand.hbm [shape: f32[512,256], index: 0, kind: input, shape index: {}]
  %s1 = inlined_call_operand.hbm [shape: bf16[256,512], index: 1, kind: input, shape index: {}]
  %s2 = inlined_call_operand.hbm [shape: f32[1,512], index: 2, kind: input, shape index: {}]
  %s3 = inlined_call_operand.hbm [shape: bf16[512,256], index: 3, kind: input, shape index: {}]
  %s4 = inlined_call_operand.vmem [shape: f32[1,256], index: 4, kind: input, shape index: {}]
  %s5 = inlined_call_operand.hbm [shape: f32[512,256], index: 5, kind: output, shape index: {}]
  %s6 = sld [smem:[#allocation0]]
  $region69: #{tpu_custom_call.1} parent=0
    _
  %s8 = ssub.s32 1, %s6
  %s9 = scalar_select 0, %s8, %s6
  $region1: #{tpu_custom_call.1} parent=0
    #allocation2 [shape = 'u8[131072]{0}', space=vmem, size = 0x20000, scoped, tag = 'input window, operand 0']
    #allocation3 [shape = 's32[2]{0}', space=sflag, size = 0x8, scoped, tag = 'scoped memory for tpu_custom_call.1']
    #allocation4 [shape = 's32[2]{0}', space=sflag, size = 0x8, scoped, tag = 'scoped memory for tpu_custom_call.1']
    #allocation5 [shape = 'u8[262144]{0}', space=vmem, size = 0x40000, scoped, tag = 'input window, operand 1, single buffered']
    #allocation6 [shape = 's32[1]{0}', space=sflag, size = 0x4, scoped, tag = 'scoped memory for tpu_custom_call.1']
    #allocation7 [shape = 'u8[2048]{0}', space=vmem, size = 0x800, scoped, tag = 'input window, operand 2, single buffered']
    #allocation8 [shape = 'u8[262144]{0}', space=vmem, size = 0x40000, scoped, tag = 'input window, operand 3, single buffered']
    #allocation9 [shape = 's32[1]{0}', space=sflag, size = 0x4, scoped, tag = 'scoped memory for tpu_custom_call.1']
    #allocation10 [shape = 'u8[131072]{0}', space=vmem, size = 0x20000, scoped, tag = 'output window, operand 0']
    %10 = vsyncpa [#allocation3], 0
    %s11 = scalar_lea.sflag [#allocation3], 1
    %12 = vsyncpa %s11, 0
    %13 = vsyncpa [#allocation6], 0
    %14 = vsyncpa [#allocation9], 0
    %15 = vsyncpa [#allocation4], 0
    %s16 = scalar_lea.sflag [#allocation4], 1
    %17 = vsyncpa %s16, 0
    loop: start=0, step=1, limit=10
    $region2: #{tpu_custom_call.1} parent=1 // loop_pre_header
      _
    $region3: #{tpu_custom_call.1} parent=1 // loop_header
      %s19 = sphi 0, %s23
      %p20 = scmp.ge.s32.totalorder %s19, 10
      %s29 = sphi 0, %s31
      %s32 = sphi 0, %s29
      %s33 = sphi 0, %s32
      %s49 = sphi 0, %s33
      %s53 = sphi 0, %s53
      %s55 = sphi 0, %s53
      %s56 = sphi 0, %s55
      %s70 = sphi 0, %s56
      %s74 = sphi 0, %s74
      %s76 = sphi 0, %s74
      %s77 = sphi 0, %s76
      %s91 = sphi 0, %s77
      %s95 = sphi 0, %s95
      %s97 = sphi 0, %s95
      %s98 = sphi 0, %s97
      %s112 = sphi 0, %s98
      %s116 = sphi 0, %s116
      %s118 = sphi 0, %s116
      %s119 = sphi 0, %s118
      %s133 = sphi 0, %s119
      %s139 = sphi 0, %s141
      %s142 = sphi 0, %s139
      %s143 = sphi 0, %s142
      %s159 = sphi 0, %s143
    $region4: #{tpu_custom_call.1} parent=1 // loop_header_branch
      %22 = sbr.rel (%p20) target = $region8
    $region5: #{tpu_custom_call.1} parent=1 // loop_body
      %s24 = ssub.s32 %s19, 1
      %s25 = ssub.s32 %s19, 2
      %s26 = sadd.s32 %s19, 1
      %s27 = ssub.s32 %s19, %s26
      %p28 = scmp.eq.s32.totalorder %s27, 0
      %s30 = sadd.s32 %s29, 1
      %s31 = scalar_select %p28, %s29, %s30
      %p34 = pneg %p28
      %p35 = scmp.eq.s32.totalorder %s19, 7
      %p36 = por %p34, %p35
      %p37 = scmp.ne.s32.totalorder %s29, %s32
      %p38 = scmp.eq.s32.totalorder %s19, 0
      %p39 = por %p37, %p38
      %p40 = scmp.ne.s32.totalorder %s29, %s32
      %p41 = scmp.eq.s32.totalorder %s24, 7
      %p42 = por %p40, %p41
      %p43 = scmp.ne.s32.totalorder %s32, %s33
      %p44 = scmp.eq.s32.totalorder %s24, 0
      %p45 = por %p43, %p44
      %p46 = scmp.ne.s32.totalorder %s32, %s33
      %p47 = scmp.eq.s32.totalorder %s25, 7
      %p48 = por %p46, %p47
      %p50 = scmp.ne.s32.totalorder %s33, %s49
      %p51 = scmp.eq.s32.totalorder %s25, 0
      %p52 = por %p50, %p51
      %s54 = sadd.s32 %s53, 1
      %p57 = scmp.eq.s32.totalorder %s19, 7
      %p58 = scmp.ne.s32.totalorder %s53, %s55
      %p59 = scmp.eq.s32.totalorder %s19, 0
      %p60 = por %p58, %p59
      %p61 = scmp.ne.s32.totalorder %s53, %s55
      %p62 = scmp.eq.s32.totalorder %s24, 7
      %p63 = por %p61, %p62
      %p64 = scmp.ne.s32.totalorder %s55, %s56
      %p65 = scmp.eq.s32.totalorder %s24, 0
      %p66 = por %p64, %p65
      %p67 = scmp.ne.s32.totalorder %s55, %s56
      %p68 = scmp.eq.s32.totalorder %s25, 7
      %p69 = por %p67, %p68
      %p71 = scmp.ne.s32.totalorder %s56, %s70
      %p72 = scmp.eq.s32.totalorder %s25, 0
      %p73 = por %p71, %p72
      %s75 = sadd.s32 %s74, 1
      %p78 = scmp.eq.s32.totalorder %s19, 7
      %p79 = scmp.ne.s32.totalorder %s74, %s76
      %p80 = scmp.eq.s32.totalorder %s19, 0
      %p81 = por %p79, %p80
      %p82 = scmp.ne.s32.totalorder %s74, %s76
      %p83 = scmp.eq.s32.totalorder %s24, 7
      %p84 = por %p82, %p83
      %p85 = scmp.ne.s32.totalorder %s76, %s77
      %p86 = scmp.eq.s32.totalorder %s24, 0
      %p87 = por %p85, %p86
      %p88 = scmp.ne.s32.totalorder %s76, %s77
      %p89 = scmp.eq.s32.totalorder %s25, 7
      %p90 = por %p88, %p89
      %p92 = scmp.ne.s32.totalorder %s77, %s91
      %p93 = scmp.eq.s32.totalorder %s25, 0
      %p94 = por %p92, %p93
      %s96 = sadd.s32 %s95, 1
      %p99 = scmp.eq.s32.totalorder %s19, 7
      %p100 = scmp.ne.s32.totalorder %s95, %s97
      %p101 = scmp.eq.s32.totalorder %s19, 0
      %p102 = por %p100, %p101
      %p103 = scmp.ne.s32.totalorder %s95, %s97
      %p104 = scmp.eq.s32.totalorder %s24, 7
      %p105 = por %p103, %p104
      %p106 = scmp.ne.s32.totalorder %s97, %s98
      %p107 = scmp.eq.s32.totalorder %s24, 0
      %p108 = por %p106, %p107
      %p109 = scmp.ne.s32.totalorder %s97, %s98
      %p110 = scmp.eq.s32.totalorder %s25, 7
      %p111 = por %p109, %p110
      %p113 = scmp.ne.s32.totalorder %s98, %s112
      %p114 = scmp.eq.s32.totalorder %s25, 0
      %p115 = por %p113, %p114
      %s117 = sadd.s32 %s116, 1
      %p120 = scmp.eq.s32.totalorder %s19, 7
      %p121 = scmp.ne.s32.totalorder %s116, %s118
      %p122 = scmp.eq.s32.totalorder %s19, 0
      %p123 = por %p121, %p122
      %p124 = scmp.ne.s32.totalorder %s116, %s118
      %p125 = scmp.eq.s32.totalorder %s24, 7
      %p126 = por %p124, %p125
      %p127 = scmp.ne.s32.totalorder %s118, %s119
      %p128 = scmp.eq.s32.totalorder %s24, 0
      %p129 = por %p127, %p128
      %p130 = scmp.ne.s32.totalorder %s118, %s119
      %p131 = scmp.eq.s32.totalorder %s25, 7
      %p132 = por %p130, %p131
      %p134 = scmp.ne.s32.totalorder %s119, %s133
      %p135 = scmp.eq.s32.totalorder %s25, 0
      %p136 = por %p134, %p135
      %s137 = ssub.s32 %s19, %s26
      %p138 = scmp.eq.s32.totalorder %s137, 0
      %s140 = sadd.s32 %s139, 1
      %s141 = scalar_select %p138, %s139, %s140
      %p144 = pneg %p138
      %p145 = scmp.eq.s32.totalorder %s19, 7
      %p146 = por %p144, %p145
      %p147 = scmp.ne.s32.totalorder %s139, %s142
      %p148 = scmp.eq.s32.totalorder %s19, 0
      %p149 = por %p147, %p148
      %p150 = scmp.ne.s32.totalorder %s139, %s142
      %p151 = scmp.eq.s32.totalorder %s24, 7
      %p152 = por %p150, %p151
      %p153 = scmp.ne.s32.totalorder %s142, %s143
      %p154 = scmp.eq.s32.totalorder %s24, 0
      %p155 = por %p153, %p154
      %p156 = scmp.ne.s32.totalorder %s142, %s143
      %p157 = scmp.eq.s32.totalorder %s25, 7
      %p158 = por %p156, %p157
      %p160 = scmp.ne.s32.totalorder %s143, %s159
      %p161 = scmp.eq.s32.totalorder %s25, 0
      %p162 = por %p160, %p161
      %p163 = scmp.le.s32.totalorder 1, %s19
      %p164 = scmp.lt.s32.totalorder %s19, 9
      %p165 = pnand %p163, %p164
      %p166 = pneg %p165
      // Predicated region
      $region9: #{tpu_custom_call.1} parent=5 // pred_check
        _
      $region10: #{tpu_custom_call.1} parent=5 // pred_check_branch
        %168 = sbr.rel (%p165) target = $region12
      $region11: #{tpu_custom_call.1} parent=5 // pred_region
        %s169 = ssub.s32 %s19, 1
        // Predicated region
        $region13: #{tpu_custom_call.1} parent=11 // pred_check
          %p170 = pneg %p66
        $region14: #{tpu_custom_call.1} parent=11 // pred_check_branch
          %172 = sbr.rel (%p170) target = $region16
        $region15: #{tpu_custom_call.1} parent=11 // pred_region
          %174 = vsyncadd [#allocation6], 0
          %s175 = sshll.u32 %s1, 4
          %s176 = int_to_ptr.hbm [resolvable:$true] %s175
          %s177 = sshll.u32 [#allocation5], 4
          %s178 = int_to_ptr.vmem [resolvable:$true] %s177
          %183 = dma.hbm_to_vmem [thread:$0]  %s176, 8192, %s178, [#allocation6], 256, 256, 16
        $region16: #{tpu_custom_call.1} parent=11 // pred_fallthru
          _
        // Predicated region
        $region17: #{tpu_custom_call.1} parent=11 // pred_check
          %p184 = pneg %p87
        $region18: #{tpu_custom_call.1} parent=11 // pred_check_branch
          %186 = sbr.rel (%p184) target = $region20
        $region19: #{tpu_custom_call.1} parent=11 // pred_region
          %188 = vsyncadd [#allocation6], 0
          %s190 = sshll.u32 %s2, 4
          %s191 = int_to_ptr.hbm [resolvable:$true] %s190
          %s192 = sshll.u32 [#allocation7], 4
          %s193 = int_to_ptr.vmem [resolvable:$true] %s192
          %195 = dma.hbm_to_vmem [thread:$0]  %s191, 64, %s193, [#allocation6]
        $region20: #{tpu_custom_call.1} parent=11 // pred_fallthru
          _
        // Predicated region
        $region21: #{tpu_custom_call.1} parent=11 // pred_check
          %p196 = pneg %p108
        $region22: #{tpu_custom_call.1} parent=11 // pred_check_branch
          %198 = sbr.rel (%p196) target = $region24
        $region23: #{tpu_custom_call.1} parent=11 // pred_region
          %200 = vsyncadd [#allocation9], 0
          %s201 = sshll.u32 %s3, 4
          %s202 = int_to_ptr.hbm [resolvable:$true] %s201
          %s203 = sshll.u32 [#allocation8], 4
          %s204 = int_to_ptr.vmem [resolvable:$true] %s203
          %209 = dma.hbm_to_vmem [thread:$0]  %s202, 8192, %s204, [#allocation9], 128, 128, 8
        $region24: #{tpu_custom_call.1} parent=11 // pred_fallthru
          _
        // Predicated region
        $region25: #{tpu_custom_call.1} parent=11 // pred_check
          %p210 = pneg %p129
        $region26: #{tpu_custom_call.1} parent=11 // pred_check_branch
          %212 = sbr.rel (%p210) target = $region28
        $region27: #{tpu_custom_call.1} parent=11 // pred_region
          _
        $region28: #{tpu_custom_call.1} parent=11 // pred_fallthru
          _
      $region12: #{tpu_custom_call.1} parent=5 // pred_fallthru
        _
      %p213 = scmp.lt.s32.totalorder %s19, 8
      // Predicated region
      $region29: #{tpu_custom_call.1} parent=5 // pred_check
        %p214 = pneg %p213
      $region30: #{tpu_custom_call.1} parent=5 // pred_check_branch
        %216 = sbr.rel (%p214) target = $region32
      $region31: #{tpu_custom_call.1} parent=5 // pred_region
        // Predicated region
        $region33: #{tpu_custom_call.1} parent=31 // pred_check
          %p217 = pneg %p39
        $region34: #{tpu_custom_call.1} parent=31 // pred_check_branch
          %219 = sbr.rel (%p217) target = $region36
        $region35: #{tpu_custom_call.1} parent=31 // pred_region
          %s220 = sand.u32 %s29, 1
          %s221 = scalar_lea.sflag [#allocation3], %s220
          %s222 = sand.u32 %s29, 1
          %s223 = smul.addr %s222, 128
          %s224 = scalar_lea.vmem [#allocation2], %s223
          %s225 = smul.u32 8, %s19
          %227 = vsyncadd %s221, 0
          %s228 = smul.addr %s225, 2
          %s229 = smul.addr %s228, 8
          %s230 = scalar_lea.hbm %s0, %s229
          %s231 = sshll.u32 %s230, 4
          %s232 = int_to_ptr.hbm [resolvable:$true] %s231
          %s233 = sshll.u32 %s224, 4
          %s234 = int_to_ptr.vmem [resolvable:$true] %s233
          %239 = dma.hbm_to_vmem [thread:$0]  %s232, 2048, %s234, %s221, 256, 256, 16
        $region36: #{tpu_custom_call.1} parent=31 // pred_fallthru
          _
      $region32: #{tpu_custom_call.1} parent=5 // pred_fallthru
        _
      %p240 = scmp.le.s32.totalorder 1, %s19
      %p241 = scmp.lt.s32.totalorder %s19, 9
      %p242 = pnand %p240, %p241
      %p243 = pneg %p242
      // Predicated region
      $region37: #{tpu_custom_call.1} parent=5 // pred_check
        _
      $region38: #{tpu_custom_call.1} parent=5 // pred_check_branch
        %245 = sbr.rel (%p242) target = $region40
      $region39: #{tpu_custom_call.1} parent=5 // pred_region
        %s246 = ssub.s32 %s19, 1
        %s247 = sand.u32 %s32, 1
        %s248 = scalar_lea.sflag [#allocation3], %s247
        %s249 = sand.u32 %s32, 1
        %s250 = smul.addr %s249, 128
        %s251 = scalar_lea.vmem [#allocation2], %s250
        // Predicated region
        $region41: #{tpu_custom_call.1} parent=39 // pred_check
          %p252 = pneg %p45
        $region42: #{tpu_custom_call.1} parent=39 // pred_check_branch
          %254 = sbr.rel (%p252) target = $region44
        $region43: #{tpu_custom_call.1} parent=39 // pred_region
          %256 = dma.done %s248, 2048
        $region44: #{tpu_custom_call.1} parent=39 // pred_fallthru
          _
        // Predicated region
        $region45: #{tpu_custom_call.1} parent=39 // pred_check
          %p257 = pneg %p66
        $region46: #{tpu_custom_call.1} parent=39 // pred_check_branch
          %259 = sbr.rel (%p257) target = $region48
        $region47: #{tpu_custom_call.1} parent=39 // pred_region
          %261 = dma.done [#allocation6], 8192
        $region48: #{tpu_custom_call.1} parent=39 // pred_fallthru
          _
        // Predicated region
        $region49: #{tpu_custom_call.1} parent=39 // pred_check
          %p262 = pneg %p87
        $region50: #{tpu_custom_call.1} parent=39 // pred_check_branch
          %264 = sbr.rel (%p262) target = $region52
        $region51: #{tpu_custom_call.1} parent=39 // pred_region
          %266 = dma.done [#allocation6], 64
        $region52: #{tpu_custom_call.1} parent=39 // pred_fallthru
          _
        // Predicated region
        $region53: #{tpu_custom_call.1} parent=39 // pred_check
          %p267 = pneg %p108
        $region54: #{tpu_custom_call.1} parent=39 // pred_check_branch
          %269 = sbr.rel (%p267) target = $region56
        $region55: #{tpu_custom_call.1} parent=39 // pred_region
          %271 = dma.done [#allocation9], 8192
        $region56: #{tpu_custom_call.1} parent=39 // pred_fallthru
          _
        %s272 = sand.u32 %s32, 1
        %s273 = scalar_lea.sflag [#allocation3], %s272
        %s274 = sand.u32 %s32, 1
        %s275 = smul.addr %s274, 128
        %s276 = scalar_lea.vmem [#allocation2], %s275
        %p277 = pneg %p45
        %p278 = pneg %p42
        %p279 = pneg %p66
        %p280 = pneg %p63
        %p281 = pneg %p87
        %p282 = pneg %p84
        %p283 = pneg %p108
        %p284 = pneg %p105
        %p285 = pneg %p129
        %p286 = pneg %p126
        %p287 = pneg %p155
        %p288 = pneg %p152
        %s289 = sand.u32 %s142, 1
        %s290 = scalar_lea.sflag [#allocation4], %s289
        %s291 = sand.u32 %s142, 1
        %s292 = smul.addr %s291, 128
        %s293 = scalar_lea.vmem [#allocation10], %s292
        %s294 = smul.u32 8, %s24
        %s295 = smul.u32 8, %s24
        %v296 = vld [vmem:[%s251] sm:$0xff]
        %v297 = vld [vmem:[%s251 + $0x8] sm:$0xff]
        %v298 = vld [vmem:[%s251 + $0x10] sm:$0xff]
        %v299 = vld [vmem:[%s251 + $0x18] sm:$0xff]
        %v300 = vld [vmem:[%s251 + $0x20] sm:$0xff]
        %v301 = vld [vmem:[%s251 + $0x28] sm:$0xff]
        %v302 = vld [vmem:[%s251 + $0x30] sm:$0xff]
        %v303 = vld [vmem:[%s251 + $0x38] sm:$0xff]
        %v304 = vld [vmem:[%s251 + $0x40] sm:$0xff]
        %v305 = vld [vmem:[%s251 + $0x48] sm:$0xff]
        %v306 = vld [vmem:[%s251 + $0x50] sm:$0xff]
        %v307 = vld [vmem:[%s251 + $0x58] sm:$0xff]
        %v308 = vld [vmem:[%s251 + $0x60] sm:$0xff]
        %v309 = vld [vmem:[%s251 + $0x68] sm:$0xff]
        %v310 = vld [vmem:[%s251 + $0x70] sm:$0xff]
        %v311 = vld [vmem:[%s251 + $0x78] sm:$0xff]
        %v312 = vadd.f32 %v296, %v297
        %313 = vadd.xlane.f32.xlu0 %v312
        %v314 = vpop.xlane.xlu0 %313
        %v315 = vadd.f32 %v298, %v299
        %316 = vadd.xlane.f32.xlu0 %v315
        %v317 = vpop.xlane.xlu0 %316
        %v318 = vadd.f32 %v300, %v301
        %319 = vadd.xlane.f32.xlu0 %v318
        %v320 = vpop.xlane.xlu0 %319
        %v321 = vadd.f32 %v302, %v303
        %322 = vadd.xlane.f32.xlu0 %v321
        %v323 = vpop.xlane.xlu0 %322
        %v324 = vadd.f32 %v304, %v305
        %325 = vadd.xlane.f32.xlu0 %v324
        %v326 = vpop.xlane.xlu0 %325
        %v327 = vadd.f32 %v306, %v307
        %328 = vadd.xlane.f32.xlu0 %v327
        %v329 = vpop.xlane.xlu0 %328
        %v330 = vadd.f32 %v308, %v309
        %331 = vadd.xlane.f32.xlu0 %v330
        %v332 = vpop.xlane.xlu0 %331
        %v333 = vadd.f32 %v310, %v311
        %334 = vadd.xlane.f32.xlu0 %v333
        %v335 = vpop.xlane.xlu0 %334
        %v336 = vrcp.pop 256.0
        %v337 = vmul.f32 256.0, %v336
        %v338 = vsub.f32 1.0, %v337
        %v339 = vmul.f32 %v336, %v338
        %v340 = vadd.f32 %v336, %v339
        %vm341 = vweird.f32 %v336
        %v342 = vsel %vm341, %v336, %v340
        %v343 = vmul.f32 %v314, %v342
        %v344 = vmul.f32 %v317, %v342
        %v345 = vmul.f32 %v320, %v342
        %v346 = vmul.f32 %v323, %v342
        %v347 = vmul.f32 %v326, %v342
        %v348 = vmul.f32 %v329, %v342
        %v349 = vmul.f32 %v332, %v342
        %v350 = vmul.f32 %v335, %v342
        %v351 = vmul.f32 %v296, %v296
        %v352 = vmul.f32 %v297, %v297
        %v353 = vmul.f32 %v298, %v298
        %v354 = vmul.f32 %v299, %v299
        %v355 = vmul.f32 %v300, %v300
        %v356 = vmul.f32 %v301, %v301
        %v357 = vmul.f32 %v302, %v302
        %v358 = vmul.f32 %v303, %v303
        %v359 = vmul.f32 %v304, %v304
        %v360 = vmul.f32 %v305, %v305
        %v361 = vmul.f32 %v306, %v306
        %v362 = vmul.f32 %v307, %v307
        %v363 = vmul.f32 %v308, %v308
        %v364 = vmul.f32 %v309, %v309
        %v365 = vmul.f32 %v310, %v310
        %v366 = vmul.f32 %v311, %v311
        %v367 = vadd.f32 %v351, %v352
        %368 = vadd.xlane.f32.xlu0 %v367
        %v369 = vpop.xlane.xlu0 %368
        %v370 = vadd.f32 %v353, %v354
        %371 = vadd.xlane.f32.xlu0 %v370
        %v372 = vpop.xlane.xlu0 %371
        %v373 = vadd.f32 %v355, %v356
        %374 = vadd.xlane.f32.xlu0 %v373
        %v375 = vpop.xlane.xlu0 %374
        %v376 = vadd.f32 %v357, %v358
        %377 = vadd.xlane.f32.xlu0 %v376
        %v378 = vpop.xlane.xlu0 %377
        %v379 = vadd.f32 %v359, %v360
        %380 = vadd.xlane.f32.xlu0 %v379
        %v381 = vpop.xlane.xlu0 %380
        %v382 = vadd.f32 %v361, %v362
        %383 = vadd.xlane.f32.xlu0 %v382
        %v384 = vpop.xlane.xlu0 %383
        %v385 = vadd.f32 %v363, %v364
        %386 = vadd.xlane.f32.xlu0 %v385
        %v387 = vpop.xlane.xlu0 %386
        %v388 = vadd.f32 %v365, %v366
        %389 = vadd.xlane.f32.xlu0 %v388
        %v390 = vpop.xlane.xlu0 %389
        %v391 = vmul.f32 %v369, %v342
        %v392 = vmul.f32 %v372, %v342
        %v393 = vmul.f32 %v375, %v342
        %v394 = vmul.f32 %v378, %v342
        %v395 = vmul.f32 %v381, %v342
        %v396 = vmul.f32 %v384, %v342
        %v397 = vmul.f32 %v387, %v342
        %v398 = vmul.f32 %v390, %v342
        %v399 = vmul.f32 %v343, %v343
        %v400 = vmul.f32 %v344, %v344
        %v401 = vmul.f32 %v345, %v345
        %v402 = vmul.f32 %v346, %v346
        %v403 = vmul.f32 %v347, %v347
        %v404 = vmul.f32 %v348, %v348
        %v405 = vmul.f32 %v349, %v349
        %v406 = vmul.f32 %v350, %v350
        %v407 = vsub.f32 %v391, %v399
        %v408 = vsub.f32 %v392, %v400
        %v409 = vsub.f32 %v393, %v401
        %v410 = vsub.f32 %v394, %v402
        %v411 = vsub.f32 %v395, %v403
        %v412 = vsub.f32 %v396, %v404
        %v413 = vsub.f32 %v397, %v405
        %v414 = vsub.f32 %v398, %v406
        %v415 = vmax.f32 %v407, 0.0
        %v416 = vmax.f32 %v408, 0.0
        %v417 = vmax.f32 %v409, 0.0
        %v418 = vmax.f32 %v410, 0.0
        %v419 = vmax.f32 %v411, 0.0
        %v420 = vmax.f32 %v412, 0.0
        %v421 = vmax.f32 %v413, 0.0
        %v422 = vmax.f32 %v414, 0.0
        %v423 = vsub.f32 %v296, %v343
        %v424 = vsub.f32 %v297, %v343
        %v425 = vsub.f32 %v298, %v344
        %v426 = vsub.f32 %v299, %v344
        %v427 = vsub.f32 %v300, %v345
        %v428 = vsub.f32 %v301, %v345
        %v429 = vsub.f32 %v302, %v346
        %v430 = vsub.f32 %v303, %v346
        %v431 = vsub.f32 %v304, %v347
        %v432 = vsub.f32 %v305, %v347
        %v433 = vsub.f32 %v306, %v348
        %v434 = vsub.f32 %v307, %v348
        %v435 = vsub.f32 %v308, %v349
        %v436 = vsub.f32 %v309, %v349
        %v437 = vsub.f32 %v310, %v350
        %v438 = vsub.f32 %v311, %v350
        %v439 = vadd.f32 %v415, 1e-05
        %v440 = vadd.f32 %v416, 1e-05
        %v441 = vadd.f32 %v417, 1e-05
        %v442 = vadd.f32 %v418, 1e-05
        %v443 = vadd.f32 %v419, 1e-05
        %v444 = vadd.f32 %v420, 1e-05
        %v445 = vadd.f32 %v421, 1e-05
        %v446 = vadd.f32 %v422, 1e-05
        %v447 = vrsqrt.pop %v439
        %v448 = vmul.f32 %v447, %v439
        %v449 = vmul.f32 %v448, %v447
        %v450 = vmul.f32 0.5, %v449
        %v451 = vsub.f32 1.5, %v450
        %v452 = vmul.f32 %v447, %v451
        %vm453 = vweird.f32 %v439
        %vm454 = vweird.f32 %v447
        %vm455 = vmor %vm453, %vm454
        %v456 = vsel %vm455, %v447, %v452
        %v457 = vrsqrt.pop %v440
        %v458 = vmul.f32 %v457, %v440
        %v459 = vmul.f32 %v458, %v457
        %v460 = vmul.f32 0.5, %v459
        %v461 = vsub.f32 1.5, %v460
        %v462 = vmul.f32 %v457, %v461
        %vm463 = vweird.f32 %v440
        %vm464 = vweird.f32 %v457
        %vm465 = vmor %vm463, %vm464
        %v466 = vsel %vm465, %v457, %v462
        %v467 = vrsqrt.pop %v441
        %v468 = vmul.f32 %v467, %v441
        %v469 = vmul.f32 %v468, %v467
        %v470 = vmul.f32 0.5, %v469
        %v471 = vsub.f32 1.5, %v470
        %v472 = vmul.f32 %v467, %v471
        %vm473 = vweird.f32 %v441
        %vm474 = vweird.f32 %v467
        %vm475 = vmor %vm473, %vm474
        %v476 = vsel %vm475, %v467, %v472
        %v477 = vrsqrt.pop %v442
        %v478 = vmul.f32 %v477, %v442
        %v479 = vmul.f32 %v478, %v477
        %v480 = vmul.f32 0.5, %v479
        %v481 = vsub.f32 1.5, %v480
        %v482 = vmul.f32 %v477, %v481
        %vm483 = vweird.f32 %v442
        %vm484 = vweird.f32 %v477
        %vm485 = vmor %vm483, %vm484
        %v486 = vsel %vm485, %v477, %v482
        %v487 = vrsqrt.pop %v443
        %v488 = vmul.f32 %v487, %v443
        %v489 = vmul.f32 %v488, %v487
        %v490 = vmul.f32 0.5, %v489
        %v491 = vsub.f32 1.5, %v490
        %v492 = vmul.f32 %v487, %v491
        %vm493 = vweird.f32 %v443
        %vm494 = vweird.f32 %v487
        %vm495 = vmor %vm493, %vm494
        %v496 = vsel %vm495, %v487, %v492
        %v497 = vrsqrt.pop %v444
        %v498 = vmul.f32 %v497, %v444
        %v499 = vmul.f32 %v498, %v497
        %v500 = vmul.f32 0.5, %v499
        %v501 = vsub.f32 1.5, %v500
        %v502 = vmul.f32 %v497, %v501
        %vm503 = vweird.f32 %v444
        %vm504 = vweird.f32 %v497
        %vm505 = vmor %vm503, %vm504
        %v506 = vsel %vm505, %v497, %v502
        %v507 = vrsqrt.pop %v445
        %v508 = vmul.f32 %v507, %v445
        %v509 = vmul.f32 %v508, %v507
        %v510 = vmul.f32 0.5, %v509
        %v511 = vsub.f32 1.5, %v510
        %v512 = vmul.f32 %v507, %v511
        %vm513 = vweird.f32 %v445
        %vm514 = vweird.f32 %v507
        %vm515 = vmor %vm513, %vm514
        %v516 = vsel %vm515, %v507, %v512
        %v517 = vrsqrt.pop %v446
        %v518 = vmul.f32 %v517, %v446
        %v519 = vmul.f32 %v518, %v517
        %v520 = vmul.f32 0.5, %v519
        %v521 = vsub.f32 1.5, %v520
        %v522 = vmul.f32 %v517, %v521
        %vm523 = vweird.f32 %v446
        %vm524 = vweird.f32 %v517
        %vm525 = vmor %vm523, %vm524
        %v526 = vsel %vm525, %v517, %v522
        %v527 = vmul.f32 %v423, %v456
        %v528 = vmul.f32 %v424, %v456
        %v529 = vmul.f32 %v425, %v466
        %v530 = vmul.f32 %v426, %v466
        %v531 = vmul.f32 %v427, %v476
        %v532 = vmul.f32 %v428, %v476
        %v533 = vmul.f32 %v429, %v486
        %v534 = vmul.f32 %v430, %v486
        %v535 = vmul.f32 %v431, %v496
        %v536 = vmul.f32 %v432, %v496
        %v537 = vmul.f32 %v433, %v506
        %v538 = vmul.f32 %v434, %v506
        %v539 = vmul.f32 %v435, %v516
        %v540 = vmul.f32 %v436, %v516
        %v541 = vmul.f32 %v437, %v526
        %v542 = vmul.f32 %v438, %v526
        %v543 = vpack.c.bf16 %v529, %v527
        %v544 = vpack.c.bf16 %v530, %v528
        %v545 = vpack.c.bf16 %v533, %v531
        %v546 = vpack.c.bf16 %v534, %v532
        %v547 = vpack.c.bf16 %v537, %v535
        %v548 = vpack.c.bf16 %v538, %v536
        %v549 = vpack.c.bf16 %v541, %v539
        %v550 = vpack.c.bf16 %v542, %v540
        %v551 = vld [vmem:[#allocation5] sm:$0xff]
        %v552 = vld [vmem:[#allocation5 + $0x8] sm:$0xff]
        %v553 = vld [vmem:[#allocation5 + $0x10] sm:$0xff]
        %v554 = vld [vmem:[#allocation5 + $0x18] sm:$0xff]
        %v555 = vld [vmem:[#allocation5 + $0x20] sm:$0xff]
        %v556 = vld [vmem:[#allocation5 + $0x28] sm:$0xff]
        %v557 = vld [vmem:[#allocation5 + $0x30] sm:$0xff]
        %v558 = vld [vmem:[#allocation5 + $0x38] sm:$0xff]
        %v559 = vld [vmem:[#allocation5 + $0x40] sm:$0xff]
        %v560 = vld [vmem:[#allocation5 + $0x48] sm:$0xff]
        %v561 = vld [vmem:[#allocation5 + $0x50] sm:$0xff]
        %v562 = vld [vmem:[#allocation5 + $0x58] sm:$0xff]
        %v563 = vld [vmem:[#allocation5 + $0x60] sm:$0xff]
        %v564 = vld [vmem:[#allocation5 + $0x68] sm:$0xff]
        %v565 = vld [vmem:[#allocation5 + $0x70] sm:$0xff]
        %v566 = vld [vmem:[#allocation5 + $0x78] sm:$0xff]
        %v567 = vld [vmem:[#allocation5 + $0x80] sm:$0xff]
        %v568 = vld [vmem:[#allocation5 + $0x88] sm:$0xff]
        %v569 = vld [vmem:[#allocation5 + $0x90] sm:$0xff]
        %v570 = vld [vmem:[#allocation5 + $0x98] sm:$0xff]
        %v571 = vld [vmem:[#allocation5 + $0xa0] sm:$0xff]
        %v572 = vld [vmem:[#allocation5 + $0xa8] sm:$0xff]
        %v573 = vld [vmem:[#allocation5 + $0xb0] sm:$0xff]
        %v574 = vld [vmem:[#allocation5 + $0xb8] sm:$0xff]
        %v575 = vld [vmem:[#allocation5 + $0xc0] sm:$0xff]
        %v576 = vld [vmem:[#allocation5 + $0xc8] sm:$0xff]
        %v577 = vld [vmem:[#allocation5 + $0xd0] sm:$0xff]
        %v578 = vld [vmem:[#allocation5 + $0xd8] sm:$0xff]
        %v579 = vld [vmem:[#allocation5 + $0xe0] sm:$0xff]
        %v580 = vld [vmem:[#allocation5 + $0xe8] sm:$0xff]
        %v581 = vld [vmem:[#allocation5 + $0xf0] sm:$0xff]
        %v582 = vld [vmem:[#allocation5 + $0xf8] sm:$0xff]
        %v583 = vld [vmem:[#allocation5 + $0x100] sm:$0xff]
        %v584 = vld [vmem:[#allocation5 + $0x108] sm:$0xff]
        %v585 = vld [vmem:[#allocation5 + $0x110] sm:$0xff]
        %v586 = vld [vmem:[#allocation5 + $0x118] sm:$0xff]
        %v587 = vld [vmem:[#allocation5 + $0x120] sm:$0xff]
        %v588 = vld [vmem:[#allocation5 + $0x128] sm:$0xff]
        %v589 = vld [vmem:[#allocation5 + $0x130] sm:$0xff]
        %v590 = vld [vmem:[#allocation5 + $0x138] sm:$0xff]
        %v591 = vld [vmem:[#allocation5 + $0x140] sm:$0xff]
        %v592 = vld [vmem:[#allocation5 + $0x148] sm:$0xff]
        %v593 = vld [vmem:[#allocation5 + $0x150] sm:$0xff]
        %v594 = vld [vmem:[#allocation5 + $0x158] sm:$0xff]
        %v595 = vld [vmem:[#allocation5 + $0x160] sm:$0xff]
        %v596 = vld [vmem:[#allocation5 + $0x168] sm:$0xff]
        %v597 = vld [vmem:[#allocation5 + $0x170] sm:$0xff]
        %v598 = vld [vmem:[#allocation5 + $0x178] sm:$0xff]
        %v599 = vld [vmem:[#allocation5 + $0x180] sm:$0xff]
        %v600 = vld [vmem:[#allocation5 + $0x188] sm:$0xff]
        %v601 = vld [vmem:[#allocation5 + $0x190] sm:$0xff]
        %v602 = vld [vmem:[#allocation5 + $0x198] sm:$0xff]
        %v603 = vld [vmem:[#allocation5 + $0x1a0] sm:$0xff]
        %v604 = vld [vmem:[#allocation5 + $0x1a8] sm:$0xff]
        %v605 = vld [vmem:[#allocation5 + $0x1b0] sm:$0xff]
        %v606 = vld [vmem:[#allocation5 + $0x1b8] sm:$0xff]
        %v607 = vld [vmem:[#allocation5 + $0x1c0] sm:$0xff]
        %v608 = vld [vmem:[#allocation5 + $0x1c8] sm:$0xff]
        %v609 = vld [vmem:[#allocation5 + $0x1d0] sm:$0xff]
        %v610 = vld [vmem:[#allocation5 + $0x1d8] sm:$0xff]
        %v611 = vld [vmem:[#allocation5 + $0x1e0] sm:$0xff]
        %v612 = vld [vmem:[#allocation5 + $0x1e8] sm:$0xff]
        %v613 = vld [vmem:[#allocation5 + $0x1f0] sm:$0xff]
        %v614 = vld [vmem:[#allocation5 + $0x1f8] sm:$0xff]
        %v615 = vld [vmem:[#allocation7] sm:$0xf]
        %v617 = vperm.slane %v615, 0
        %v618 = vperm.slane %v615, 1
        %v619 = vperm.slane %v615, 2
        %v620 = vperm.slane %v615, 3
        %v689 = vunpack.c.l.b16 %v551
        %v690 = vunpack.c.h.b16 %v551
        %v691 = vunpack.c.l.b16 %v552
        %v692 = vunpack.c.h.b16 %v552
        %v693 = vunpack.c.l.b16 %v553
        %v694 = vunpack.c.h.b16 %v553
        %v695 = vunpack.c.l.b16 %v554
        %v696 = vunpack.c.h.b16 %v554
        %v697 = vunpack.c.l.b16 %v555
        %v698 = vunpack.c.h.b16 %v555
        %v699 = vunpack.c.l.b16 %v556
        %v700 = vunpack.c.h.b16 %v556
        %v701 = vunpack.c.l.b16 %v557
        %v702 = vunpack.c.h.b16 %v557
        %v703 = vunpack.c.l.b16 %v558
        %v704 = vunpack.c.h.b16 %v558
        %v705 = vunpack.c.l.b16 %v559
        %v706 = vunpack.c.h.b16 %v559
        %v707 = vunpack.c.l.b16 %v560
        %v708 = vunpack.c.h.b16 %v560
        %v709 = vunpack.c.l.b16 %v561
        %v710 = vunpack.c.h.b16 %v561
        %v711 = vunpack.c.l.b16 %v562
        %v712 = vunpack.c.h.b16 %v562
        %v713 = vunpack.c.l.b16 %v563
        %v714 = vunpack.c.h.b16 %v563
        %v715 = vunpack.c.l.b16 %v564
        %v716 = vunpack.c.h.b16 %v564
        %v717 = vunpack.c.l.b16 %v565
        %v718 = vunpack.c.h.b16 %v565
        %v719 = vunpack.c.l.b16 %v566
        %v720 = vunpack.c.h.b16 %v566
        %v721 = vunpack.c.l.b16 %v567
        %v722 = vunpack.c.h.b16 %v567
        %v723 = vunpack.c.l.b16 %v568
        %v724 = vunpack.c.h.b16 %v568
        %v725 = vunpack.c.l.b16 %v569
        %v726 = vunpack.c.h.b16 %v569
        %v727 = vunpack.c.l.b16 %v570
        %v728 = vunpack.c.h.b16 %v570
        %v729 = vunpack.c.l.b16 %v571
        %v730 = vunpack.c.h.b16 %v571
        %v731 = vunpack.c.l.b16 %v572
        %v732 = vunpack.c.h.b16 %v572
        %v733 = vunpack.c.l.b16 %v573
        %v734 = vunpack.c.h.b16 %v573
        %v735 = vunpack.c.l.b16 %v574
        %v736 = vunpack.c.h.b16 %v574
        %v737 = vunpack.c.l.b16 %v575
        %v738 = vunpack.c.h.b16 %v575
        %v739 = vunpack.c.l.b16 %v576
        %v740 = vunpack.c.h.b16 %v576
        %v741 = vunpack.c.l.b16 %v577
        %v742 = vunpack.c.h.b16 %v577
        %v743 = vunpack.c.l.b16 %v578
        %v744 = vunpack.c.h.b16 %v578
        %v745 = vunpack.c.l.b16 %v579
        %v746 = vunpack.c.h.b16 %v579
        %v747 = vunpack.c.l.b16 %v580
        %v748 = vunpack.c.h.b16 %v580
        %v749 = vunpack.c.l.b16 %v581
        %v750 = vunpack.c.h.b16 %v581
        %v751 = vunpack.c.l.b16 %v582
        %v752 = vunpack.c.h.b16 %v582
        %v753 = vunpack.c.l.b16 %v583
        %v754 = vunpack.c.h.b16 %v583
        %v755 = vunpack.c.l.b16 %v584
        %v756 = vunpack.c.h.b16 %v584
        %v757 = vunpack.c.l.b16 %v585
        %v758 = vunpack.c.h.b16 %v585
        %v759 = vunpack.c.l.b16 %v586
        %v760 = vunpack.c.h.b16 %v586
        %v761 = vunpack.c.l.b16 %v587
        %v762 = vunpack.c.h.b16 %v587
        %v763 = vunpack.c.l.b16 %v588
        %v764 = vunpack.c.h.b16 %v588
        %v765 = vunpack.c.l.b16 %v589
        %v766 = vunpack.c.h.b16 %v589
        %v767 = vunpack.c.l.b16 %v590
        %v768 = vunpack.c.h.b16 %v590
        %v769 = vunpack.c.l.b16 %v591
        %v770 = vunpack.c.h.b16 %v591
        %v771 = vunpack.c.l.b16 %v592
        %v772 = vunpack.c.h.b16 %v592
        %v773 = vunpack.c.l.b16 %v593
        %v774 = vunpack.c.h.b16 %v593
        %v775 = vunpack.c.l.b16 %v594
        %v776 = vunpack.c.h.b16 %v594
        %v777 = vunpack.c.l.b16 %v595
        %v778 = vunpack.c.h.b16 %v595
        %v779 = vunpack.c.l.b16 %v596
        %v780 = vunpack.c.h.b16 %v596
        %v781 = vunpack.c.l.b16 %v597
        %v782 = vunpack.c.h.b16 %v597
        %v783 = vunpack.c.l.b16 %v598
        %v784 = vunpack.c.h.b16 %v598
        %v785 = vunpack.c.l.b16 %v599
        %v786 = vunpack.c.h.b16 %v599
        %v787 = vunpack.c.l.b16 %v600
        %v788 = vunpack.c.h.b16 %v600
        %v789 = vunpack.c.l.b16 %v601
        %v790 = vunpack.c.h.b16 %v601
        %v791 = vunpack.c.l.b16 %v602
        %v792 = vunpack.c.h.b16 %v602
        %v793 = vunpack.c.l.b16 %v603
        %v794 = vunpack.c.h.b16 %v603
        %v795 = vunpack.c.l.b16 %v604
        %v796 = vunpack.c.h.b16 %v604
        %v797 = vunpack.c.l.b16 %v605
        %v798 = vunpack.c.h.b16 %v605
        %v799 = vunpack.c.l.b16 %v606
        %v800 = vunpack.c.h.b16 %v606
        %v801 = vunpack.c.l.b16 %v607
        %v802 = vunpack.c.h.b16 %v607
        %v803 = vunpack.c.l.b16 %v608
        %v804 = vunpack.c.h.b16 %v608
        %v805 = vunpack.c.l.b16 %v609
        %v806 = vunpack.c.h.b16 %v609
        %v807 = vunpack.c.l.b16 %v610
        %v808 = vunpack.c.h.b16 %v610
        %v809 = vunpack.c.l.b16 %v611
        %v810 = vunpack.c.h.b16 %v611
        %v811 = vunpack.c.l.b16 %v612
        %v812 = vunpack.c.h.b16 %v612
        %v813 = vunpack.c.l.b16 %v613
        %v814 = vunpack.c.h.b16 %v613
        %v815 = vunpack.c.l.b16 %v614
        %v816 = vunpack.c.h.b16 %v614
        %v817 = vpack.c.b16 %v693, %v689
        %v818 = vpack.c.b16 %v694, %v690
        %v819 = vpack.c.b16 %v695, %v691
        %v820 = vpack.c.b16 %v696, %v692
        %v821 = vpack.c.b16 %v701, %v697
        %v822 = vpack.c.b16 %v702, %v698
        %v823 = vpack.c.b16 %v703, %v699
        %v824 = vpack.c.b16 %v704, %v700
        %v825 = vpack.c.b16 %v709, %v705
        %v826 = vpack.c.b16 %v710, %v706
        %v827 = vpack.c.b16 %v711, %v707
        %v828 = vpack.c.b16 %v712, %v708
        %v829 = vpack.c.b16 %v717, %v713
        %v830 = vpack.c.b16 %v718, %v714
        %v831 = vpack.c.b16 %v719, %v715
        %v832 = vpack.c.b16 %v720, %v716
        %v833 = vpack.c.b16 %v725, %v721
        %v834 = vpack.c.b16 %v726, %v722
        %v835 = vpack.c.b16 %v727, %v723
        %v836 = vpack.c.b16 %v728, %v724
        %v837 = vpack.c.b16 %v733, %v729
        %v838 = vpack.c.b16 %v734, %v730
        %v839 = vpack.c.b16 %v735, %v731
        %v840 = vpack.c.b16 %v736, %v732
        %v841 = vpack.c.b16 %v741, %v737
        %v842 = vpack.c.b16 %v742, %v738
        %v843 = vpack.c.b16 %v743, %v739
        %v844 = vpack.c.b16 %v744, %v740
        %v845 = vpack.c.b16 %v749, %v745
        %v846 = vpack.c.b16 %v750, %v746
        %v847 = vpack.c.b16 %v751, %v747
        %v848 = vpack.c.b16 %v752, %v748
        %v849 = vpack.c.b16 %v757, %v753
        %v850 = vpack.c.b16 %v758, %v754
        %v851 = vpack.c.b16 %v759, %v755
        %v852 = vpack.c.b16 %v760, %v756
        %v853 = vpack.c.b16 %v765, %v761
        %v854 = vpack.c.b16 %v766, %v762
        %v855 = vpack.c.b16 %v767, %v763
        %v856 = vpack.c.b16 %v768, %v764
        %v857 = vpack.c.b16 %v773, %v769
        %v858 = vpack.c.b16 %v774, %v770
        %v859 = vpack.c.b16 %v775, %v771
        %v860 = vpack.c.b16 %v776, %v772
        %v861 = vpack.c.b16 %v781, %v777
        %v862 = vpack.c.b16 %v782, %v778
        %v863 = vpack.c.b16 %v783, %v779
        %v864 = vpack.c.b16 %v784, %v780
        %v865 = vpack.c.b16 %v789, %v785
        %v866 = vpack.c.b16 %v790, %v786
        %v867 = vpack.c.b16 %v791, %v787
        %v868 = vpack.c.b16 %v792, %v788
        %v869 = vpack.c.b16 %v797, %v793
        %v870 = vpack.c.b16 %v798, %v794
        %v871 = vpack.c.b16 %v799, %v795
        %v872 = vpack.c.b16 %v800, %v796
        %v873 = vpack.c.b16 %v805, %v801
        %v874 = vpack.c.b16 %v806, %v802
        %v875 = vpack.c.b16 %v807, %v803
        %v876 = vpack.c.b16 %v808, %v804
        %v877 = vpack.c.b16 %v813, %v809
        %v878 = vpack.c.b16 %v814, %v810
        %v879 = vpack.c.b16 %v815, %v811
        %v880 = vpack.c.b16 %v816, %v812
        %945 = vmatpush.bf16.msra.mxu0 %v845
        %946 = vmatpush.bf16.msra.mxu0 %v841
        %947 = vmatpush.bf16.msra.mxu0 %v837
        %948 = vmatpush.bf16.msra.mxu0 %v833
        %949 = vmatpush.bf16.msra.mxu0 %v829
        %950 = vmatpush.bf16.msra.mxu0 %v825
        %951 = vmatpush.bf16.msra.mxu0 %v821
        %952 = vmatpush.bf16.msra.mxu0 %v817
        %953 = vmatmul.bf16.gmra.mxu0 %v543
        %v954 = vpop.f32.mrf.mxu0
        %v955 = vadd.f32 %v617, %v954
        %v956 = vpop.f32.mrf.mxu0
        %v957 = vadd.f32 %v617, %v956
        %958 = vmatmul.bf16.gmra.mxu0 %v545
        %v959 = vpop.f32.mrf.mxu0
        %v960 = vadd.f32 %v617, %v959
        %v961 = vpop.f32.mrf.mxu0
        %v962 = vadd.f32 %v617, %v961
        %963 = vmatmul.bf16.gmra.mxu0 %v547
        %v964 = vpop.f32.mrf.mxu0
        %v965 = vadd.f32 %v617, %v964
        %v966 = vpop.f32.mrf.mxu0
        %v967 = vadd.f32 %v617, %v966
        %968 = vmatmul.bf16.gmra.mxu0 %v549
        %v969 = vpop.f32.mrf.mxu0
        %v970 = vadd.f32 %v617, %v969
        %v971 = vpop.f32.mrf.mxu0
        %v972 = vadd.f32 %v617, %v971
        %973 = vdwg.mxu0
        %974 = vmatpush.bf16.msra.mxu0 %v877
        %975 = vmatpush.bf16.msra.mxu0 %v873
        %976 = vmatpush.bf16.msra.mxu0 %v869
        %977 = vmatpush.bf16.msra.mxu0 %v865
        %978 = vmatpush.bf16.msra.mxu0 %v861
        %979 = vmatpush.bf16.msra.mxu0 %v857
        %980 = vmatpush.bf16.msra.mxu0 %v853
        %981 = vmatpush.bf16.msra.mxu0 %v849
        %982 = vmatmul.bf16.gmra.mxu0 %v544
        %v983 = vpop.f32.mrf.mxu0
        %v984 = vadd.f32 %v955, %v983
        %v985 = vpop.f32.mrf.mxu0
        %v986 = vadd.f32 %v957, %v985
        %987 = vmatmul.bf16.gmra.mxu0 %v546
        %v988 = vpop.f32.mrf.mxu0
        %v989 = vadd.f32 %v960, %v988
        %v990 = vpop.f32.mrf.mxu0
        %v991 = vadd.f32 %v962, %v990
        %992 = vmatmul.bf16.gmra.mxu0 %v548
        %v993 = vpop.f32.mrf.mxu0
        %v994 = vadd.f32 %v965, %v993
        %v995 = vpop.f32.mrf.mxu0
        %v996 = vadd.f32 %v967, %v995
        %997 = vmatmul.bf16.gmra.mxu0 %v550
        %v998 = vpop.f32.mrf.mxu0
        %v999 = vadd.f32 %v970, %v998
        %v1000 = vpop.f32.mrf.mxu0
        %v1001 = vadd.f32 %v972, %v1000
        %1002 = vdwg.mxu0
        %1003 = vmatpush.bf16.msra.mxu0 %v846
        %1004 = vmatpush.bf16.msra.mxu0 %v842
        %1005 = vmatpush.bf16.msra.mxu0 %v838
        %1006 = vmatpush.bf16.msra.mxu0 %v834
        %1007 = vmatpush.bf16.msra.mxu0 %v830
        %1008 = vmatpush.bf16.msra.mxu0 %v826
        %1009 = vmatpush.bf16.msra.mxu0 %v822
        %1010 = vmatpush.bf16.msra.mxu0 %v818
        %1011 = vmatmul.bf16.gmra.mxu0 %v543
        %v1012 = vpop.f32.mrf.mxu0
        %v1013 = vadd.f32 %v618, %v1012
        %v1014 = vpop.f32.mrf.mxu0
        %v1015 = vadd.f32 %v618, %v1014
        %1016 = vmatmul.bf16.gmra.mxu0 %v545
        %v1017 = vpop.f32.mrf.mxu0
        %v1018 = vadd.f32 %v618, %v1017
        %v1019 = vpop.f32.mrf.mxu0
        %v1020 = vadd.f32 %v618, %v1019
        %1021 = vmatmul.bf16.gmra.mxu0 %v547
        %v1022 = vpop.f32.mrf.mxu0
        %v1023 = vadd.f32 %v618, %v1022
        %v1024 = vpop.f32.mrf.mxu0
        %v1025 = vadd.f32 %v618, %v1024
        %1026 = vmatmul.bf16.gmra.mxu0 %v549
        %v1027 = vpop.f32.mrf.mxu0
        %v1028 = vadd.f32 %v618, %v1027
        %v1029 = vpop.f32.mrf.mxu0
        %v1030 = vadd.f32 %v618, %v1029
        %1031 = vdwg.mxu0
        %1032 = vmatpush.bf16.msra.mxu0 %v878
        %1033 = vmatpush.bf16.msra.mxu0 %v874
        %1034 = vmatpush.bf16.msra.mxu0 %v870
        %1035 = vmatpush.bf16.msra.mxu0 %v866
        %1036 = vmatpush.bf16.msra.mxu0 %v862
        %1037 = vmatpush.bf16.msra.mxu0 %v858
        %1038 = vmatpush.bf16.msra.mxu0 %v854
        %1039 = vmatpush.bf16.msra.mxu0 %v850
        %1040 = vmatmul.bf16.gmra.mxu0 %v544
        %v1041 = vpop.f32.mrf.mxu0
        %v1042 = vadd.f32 %v1013, %v1041
        %v1043 = vpop.f32.mrf.mxu0
        %v1044 = vadd.f32 %v1015, %v1043
        %1045 = vmatmul.bf16.gmra.mxu0 %v546
        %v1046 = vpop.f32.mrf.mxu0
        %v1047 = vadd.f32 %v1018, %v1046
        %v1048 = vpop.f32.mrf.mxu0
        %v1049 = vadd.f32 %v1020, %v1048
        %1050 = vmatmul.bf16.gmra.mxu0 %v548
        %v1051 = vpop.f32.mrf.mxu0
        %v1052 = vadd.f32 %v1023, %v1051
        %v1053 = vpop.f32.mrf.mxu0
        %v1054 = vadd.f32 %v1025, %v1053
        %1055 = vmatmul.bf16.gmra.mxu0 %v550
        %v1056 = vpop.f32.mrf.mxu0
        %v1057 = vadd.f32 %v1028, %v1056
        %v1058 = vpop.f32.mrf.mxu0
        %v1059 = vadd.f32 %v1030, %v1058
        %1060 = vdwg.mxu0
        %1061 = vmatpush.bf16.msra.mxu0 %v847
        %1062 = vmatpush.bf16.msra.mxu0 %v843
        %1063 = vmatpush.bf16.msra.mxu0 %v839
        %1064 = vmatpush.bf16.msra.mxu0 %v835
        %1065 = vmatpush.bf16.msra.mxu0 %v831
        %1066 = vmatpush.bf16.msra.mxu0 %v827
        %1067 = vmatpush.bf16.msra.mxu0 %v823
        %1068 = vmatpush.bf16.msra.mxu0 %v819
        %1069 = vmatmul.bf16.gmra.mxu0 %v543
        %v1070 = vpop.f32.mrf.mxu0
        %v1071 = vadd.f32 %v619, %v1070
        %v1072 = vpop.f32.mrf.mxu0
        %v1073 = vadd.f32 %v619, %v1072
        %1074 = vmatmul.bf16.gmra.mxu0 %v545
        %v1075 = vpop.f32.mrf.mxu0
        %v1076 = vadd.f32 %v619, %v1075
        %v1077 = vpop.f32.mrf.mxu0
        %v1078 = vadd.f32 %v619, %v1077
        %1079 = vmatmul.bf16.gmra.mxu0 %v547
        %v1080 = vpop.f32.mrf.mxu0
        %v1081 = vadd.f32 %v619, %v1080
        %v1082 = vpop.f32.mrf.mxu0
        %v1083 = vadd.f32 %v619, %v1082
        %1084 = vmatmul.bf16.gmra.mxu0 %v549
        %v1085 = vpop.f32.mrf.mxu0
        %v1086 = vadd.f32 %v619, %v1085
        %v1087 = vpop.f32.mrf.mxu0
        %v1088 = vadd.f32 %v619, %v1087
        %1089 = vdwg.mxu0
        %1090 = vmatpush.bf16.msra.mxu0 %v879
        %1091 = vmatpush.bf16.msra.mxu0 %v875
        %1092 = vmatpush.bf16.msra.mxu0 %v871
        %1093 = vmatpush.bf16.msra.mxu0 %v867
        %1094 = vmatpush.bf16.msra.mxu0 %v863
        %1095 = vmatpush.bf16.msra.mxu0 %v859
        %1096 = vmatpush.bf16.msra.mxu0 %v855
        %1097 = vmatpush.bf16.msra.mxu0 %v851
        %1098 = vmatmul.bf16.gmra.mxu0 %v544
        %v1099 = vpop.f32.mrf.mxu0
        %v1100 = vadd.f32 %v1071, %v1099
        %v1101 = vpop.f32.mrf.mxu0
        %v1102 = vadd.f32 %v1073, %v1101
        %1103 = vmatmul.bf16.gmra.mxu0 %v546
        %v1104 = vpop.f32.mrf.mxu0
        %v1105 = vadd.f32 %v1076, %v1104
        %v1106 = vpop.f32.mrf.mxu0
        %v1107 = vadd.f32 %v1078, %v1106
        %1108 = vmatmul.bf16.gmra.mxu0 %v548
        %v1109 = vpop.f32.mrf.mxu0
        %v1110 = vadd.f32 %v1081, %v1109
        %v1111 = vpop.f32.mrf.mxu0
        %v1112 = vadd.f32 %v1083, %v1111
        %1113 = vmatmul.bf16.gmra.mxu0 %v550
        %v1114 = vpop.f32.mrf.mxu0
        %v1115 = vadd.f32 %v1086, %v1114
        %v1116 = vpop.f32.mrf.mxu0
        %v1117 = vadd.f32 %v1088, %v1116
        %1118 = vdwg.mxu0
        %1119 = vmatpush.bf16.msra.mxu0 %v848
        %1120 = vmatpush.bf16.msra.mxu0 %v844
        %1121 = vmatpush.bf16.msra.mxu0 %v840
        %1122 = vmatpush.bf16.msra.mxu0 %v836
        %1123 = vmatpush.bf16.msra.mxu0 %v832
        %1124 = vmatpush.bf16.msra.mxu0 %v828
        %1125 = vmatpush.bf16.msra.mxu0 %v824
        %1126 = vmatpush.bf16.msra.mxu0 %v820
        %1127 = vmatmul.bf16.gmra.mxu0 %v543
        %v1128 = vpop.f32.mrf.mxu0
        %v1129 = vadd.f32 %v620, %v1128
        %v1130 = vpop.f32.mrf.mxu0
        %v1131 = vadd.f32 %v620, %v1130
        %1132 = vmatmul.bf16.gmra.mxu0 %v545
        %v1133 = vpop.f32.mrf.mxu0
        %v1134 = vadd.f32 %v620, %v1133
        %v1135 = vpop.f32.mrf.mxu0
        %v1136 = vadd.f32 %v620, %v1135
        %1137 = vmatmul.bf16.gmra.mxu0 %v547
        %v1138 = vpop.f32.mrf.mxu0
        %v1139 = vadd.f32 %v620, %v1138
        %v1140 = vpop.f32.mrf.mxu0
        %v1141 = vadd.f32 %v620, %v1140
        %1142 = vmatmul.bf16.gmra.mxu0 %v549
        %v1143 = vpop.f32.mrf.mxu0
        %v1144 = vadd.f32 %v620, %v1143
        %v1145 = vpop.f32.mrf.mxu0
        %v1146 = vadd.f32 %v620, %v1145
        %1147 = vdwg.mxu0
        %1148 = vmatpush.bf16.msra.mxu0 %v880
        %1149 = vmatpush.bf16.msra.mxu0 %v876
        %1150 = vmatpush.bf16.msra.mxu0 %v872
        %1151 = vmatpush.bf16.msra.mxu0 %v868
        %1152 = vmatpush.bf16.msra.mxu0 %v864
        %1153 = vmatpush.bf16.msra.mxu0 %v860
        %1154 = vmatpush.bf16.msra.mxu0 %v856
        %1155 = vmatpush.bf16.msra.mxu0 %v852
        %1156 = vmatmul.bf16.gmra.mxu0 %v544
        %v1157 = vpop.f32.mrf.mxu0
        %v1158 = vadd.f32 %v1129, %v1157
        %v1159 = vpop.f32.mrf.mxu0
        %v1160 = vadd.f32 %v1131, %v1159
        %1161 = vmatmul.bf16.gmra.mxu0 %v546
        %v1162 = vpop.f32.mrf.mxu0
        %v1163 = vadd.f32 %v1134, %v1162
        %v1164 = vpop.f32.mrf.mxu0
        %v1165 = vadd.f32 %v1136, %v1164
        %1166 = vmatmul.bf16.gmra.mxu0 %v548
        %v1167 = vpop.f32.mrf.mxu0
        %v1168 = vadd.f32 %v1139, %v1167
        %v1169 = vpop.f32.mrf.mxu0
        %v1170 = vadd.f32 %v1141, %v1169
        %1171 = vmatmul.bf16.gmra.mxu0 %v550
        %v1172 = vpop.f32.mrf.mxu0
        %v1173 = vadd.f32 %v1144, %v1172
        %v1174 = vpop.f32.mrf.mxu0
        %v1175 = vadd.f32 %v1146, %v1174
        %1176 = vdwg.mxu0
        %v1177 = vxor.u32 %v984, 2147483648
        %v1178 = vxor.u32 %v1042, 2147483648
        %v1179 = vxor.u32 %v1100, 2147483648
        %v1180 = vxor.u32 %v1158, 2147483648
        %v1181 = vxor.u32 %v986, 2147483648
        %v1182 = vxor.u32 %v1044, 2147483648
        %v1183 = vxor.u32 %v1102, 2147483648
        %v1184 = vxor.u32 %v1160, 2147483648
        %v1185 = vxor.u32 %v989, 2147483648
        %v1186 = vxor.u32 %v1047, 2147483648
        %v1187 = vxor.u32 %v1105, 2147483648
        %v1188 = vxor.u32 %v1163, 2147483648
        %v1189 = vxor.u32 %v991, 2147483648
        %v1190 = vxor.u32 %v1049, 2147483648
        %v1191 = vxor.u32 %v1107, 2147483648
        %v1192 = vxor.u32 %v1165, 2147483648
        %v1193 = vxor.u32 %v994, 2147483648
        %v1194 = vxor.u32 %v1052, 2147483648
        %v1195 = vxor.u32 %v1110, 2147483648
        %v1196 = vxor.u32 %v1168, 2147483648
        %v1197 = vxor.u32 %v996, 2147483648
        %v1198 = vxor.u32 %v1054, 2147483648
        %v1199 = vxor.u32 %v1112, 2147483648
        %v1200 = vxor.u32 %v1170, 2147483648
        %v1201 = vxor.u32 %v999, 2147483648
        %v1202 = vxor.u32 %v1057, 2147483648
        %v1203 = vxor.u32 %v1115, 2147483648
        %v1204 = vxor.u32 %v1173, 2147483648
        %v1205 = vxor.u32 %v1001, 2147483648
        %v1206 = vxor.u32 %v1059, 2147483648
        %v1207 = vxor.u32 %v1117, 2147483648
        %v1208 = vxor.u32 %v1175, 2147483648
        %v1209 = vmul.f32 %v1177, 1.442695
        %v1210 = vpow.pop %v1209
        %v1211 = vmul.f32 %v1178, 1.442695
        %v1212 = vpow.pop %v1211
        %v1213 = vmul.f32 %v1179, 1.442695
        %v1214 = vpow.pop %v1213
        %v1215 = vmul.f32 %v1180, 1.442695
        %v1216 = vpow.pop %v1215
        %v1217 = vmul.f32 %v1181, 1.442695
        %v1218 = vpow.pop %v1217
        %v1219 = vmul.f32 %v1182, 1.442695
        %v1220 = vpow.pop %v1219
        %v1221 = vmul.f32 %v1183, 1.442695
        %v1222 = vpow.pop %v1221
        %v1223 = vmul.f32 %v1184, 1.442695
        %v1224 = vpow.pop %v1223
        %v1225 = vmul.f32 %v1185, 1.442695
        %v1226 = vpow.pop %v1225
        %v1227 = vmul.f32 %v1186, 1.442695
        %v1228 = vpow.pop %v1227
        %v1229 = vmul.f32 %v1187, 1.442695
        %v1230 = vpow.pop %v1229
        %v1231 = vmul.f32 %v1188, 1.442695
        %v1232 = vpow.pop %v1231
        %v1233 = vmul.f32 %v1189, 1.442695
        %v1234 = vpow.pop %v1233
        %v1235 = vmul.f32 %v1190, 1.442695
        %v1236 = vpow.pop %v1235
        %v1237 = vmul.f32 %v1191, 1.442695
        %v1238 = vpow.pop %v1237
        %v1239 = vmul.f32 %v1192, 1.442695
        %v1240 = vpow.pop %v1239
        %v1241 = vmul.f32 %v1193, 1.442695
        %v1242 = vpow.pop %v1241
        %v1243 = vmul.f32 %v1194, 1.442695
        %v1244 = vpow.pop %v1243
        %v1245 = vmul.f32 %v1195, 1.442695
        %v1246 = vpow.pop %v1245
        %v1247 = vmul.f32 %v1196, 1.442695
        %v1248 = vpow.pop %v1247
        %v1249 = vmul.f32 %v1197, 1.442695
        %v1250 = vpow.pop %v1249
        %v1251 = vmul.f32 %v1198, 1.442695
        %v1252 = vpow.pop %v1251
        %v1253 = vmul.f32 %v1199, 1.442695
        %v1254 = vpow.pop %v1253
        %v1255 = vmul.f32 %v1200, 1.442695
        %v1256 = vpow.pop %v1255
        %v1257 = vmul.f32 %v1201, 1.442695
        %v1258 = vpow.pop %v1257
        %v1259 = vmul.f32 %v1202, 1.442695
        %v1260 = vpow.pop %v1259
        %v1261 = vmul.f32 %v1203, 1.442695
        %v1262 = vpow.pop %v1261
        %v1263 = vmul.f32 %v1204, 1.442695
        %v1264 = vpow.pop %v1263
        %v1265 = vmul.f32 %v1205, 1.442695
        %v1266 = vpow.pop %v1265
        %v1267 = vmul.f32 %v1206, 1.442695
        %v1268 = vpow.pop %v1267
        %v1269 = vmul.f32 %v1207, 1.442695
        %v1270 = vpow.pop %v1269
        %v1271 = vmul.f32 %v1208, 1.442695
        %v1272 = vpow.pop %v1271
        %v1273 = vadd.f32 %v1210, 1.0
        %v1274 = vadd.f32 %v1212, 1.0
        %v1275 = vadd.f32 %v1214, 1.0
        %v1276 = vadd.f32 %v1216, 1.0
        %v1277 = vadd.f32 %v1218, 1.0
        %v1278 = vadd.f32 %v1220, 1.0
        %v1279 = vadd.f32 %v1222, 1.0
        %v1280 = vadd.f32 %v1224, 1.0
        %v1281 = vadd.f32 %v1226, 1.0
        %v1282 = vadd.f32 %v1228, 1.0
        %v1283 = vadd.f32 %v1230, 1.0
        %v1284 = vadd.f32 %v1232, 1.0
        %v1285 = vadd.f32 %v1234, 1.0
        %v1286 = vadd.f32 %v1236, 1.0
        %v1287 = vadd.f32 %v1238, 1.0
        %v1288 = vadd.f32 %v1240, 1.0
        %v1289 = vadd.f32 %v1242, 1.0
        %v1290 = vadd.f32 %v1244, 1.0
        %v1291 = vadd.f32 %v1246, 1.0
        %v1292 = vadd.f32 %v1248, 1.0
        %v1293 = vadd.f32 %v1250, 1.0
        %v1294 = vadd.f32 %v1252, 1.0
        %v1295 = vadd.f32 %v1254, 1.0
        %v1296 = vadd.f32 %v1256, 1.0
        %v1297 = vadd.f32 %v1258, 1.0
        %v1298 = vadd.f32 %v1260, 1.0
        %v1299 = vadd.f32 %v1262, 1.0
        %v1300 = vadd.f32 %v1264, 1.0
        %v1301 = vadd.f32 %v1266, 1.0
        %v1302 = vadd.f32 %v1268, 1.0
        %v1303 = vadd.f32 %v1270, 1.0
        %v1304 = vadd.f32 %v1272, 1.0
        %v1305 = vrcp.pop %v1273
        %v1306 = vmul.f32 %v1273, %v1305
        %v1307 = vsub.f32 1.0, %v1306
        %v1308 = vmul.f32 %v1305, %v1307
        %v1309 = vadd.f32 %v1305, %v1308
        %vm1310 = vweird.f32 %v1273
        %vm1311 = vweird.f32 %v1305
        %vm1312 = vmor %vm1310, %vm1311
        %v1313 = vsel %vm1312, %v1305, %v1309
        %v1314 = vand.u32 2147483647, %v1273
        %vm1315 = vcmp.eq.f32.partialorder %v1314, 8.507059e+37
        %v1316 = vand.u32 %v1273, 2147483648
        %v1317 = vor.u32 1.1754944e-38, %v1316
        %v1318 = vsel %vm1315, %v1317, %v1313
        %v1319 = vmul.f32 1.0, %v1318
        %v1320 = vrcp.pop %v1274
        %v1321 = vmul.f32 %v1274, %v1320
        %v1322 = vsub.f32 1.0, %v1321
        %v1323 = vmul.f32 %v1320, %v1322
        %v1324 = vadd.f32 %v1320, %v1323
        %vm1325 = vweird.f32 %v1274
        %vm1326 = vweird.f32 %v1320
        %vm1327 = vmor %vm1325, %vm1326
        %v1328 = vsel %vm1327, %v1320, %v1324
        %v1329 = vand.u32 2147483647, %v1274
        %vm1330 = vcmp.eq.f32.partialorder %v1329, 8.507059e+37
        %v1331 = vand.u32 %v1274, 2147483648
        %v1332 = vor.u32 1.1754944e-38, %v1331
        %v1333 = vsel %vm1330, %v1332, %v1328
        %v1334 = vmul.f32 1.0, %v1333
        %v1335 = vrcp.pop %v1275
        %v1336 = vmul.f32 %v1275, %v1335
        %v1337 = vsub.f32 1.0, %v1336
        %v1338 = vmul.f32 %v1335, %v1337
        %v1339 = vadd.f32 %v1335, %v1338
        %vm1340 = vweird.f32 %v1275
        %vm1341 = vweird.f32 %v1335
        %vm1342 = vmor %vm1340, %vm1341
        %v1343 = vsel %vm1342, %v1335, %v1339
        %v1344 = vand.u32 2147483647, %v1275
        %vm1345 = vcmp.eq.f32.partialorder %v1344, 8.507059e+37
        %v1346 = vand.u32 %v1275, 2147483648
        %v1347 = vor.u32 1.1754944e-38, %v1346
        %v1348 = vsel %vm1345, %v1347, %v1343
        %v1349 = vmul.f32 1.0, %v1348
        %v1350 = vrcp.pop %v1276
        %v1351 = vmul.f32 %v1276, %v1350
        %v1352 = vsub.f32 1.0, %v1351
        %v1353 = vmul.f32 %v1350, %v1352
        %v1354 = vadd.f32 %v1350, %v1353
        %vm1355 = vweird.f32 %v1276
        %vm1356 = vweird.f32 %v1350
        %vm1357 = vmor %vm1355, %vm1356
        %v1358 = vsel %vm1357, %v1350, %v1354
        %v1359 = vand.u32 2147483647, %v1276
        %vm1360 = vcmp.eq.f32.partialorder %v1359, 8.507059e+37
        %v1361 = vand.u32 %v1276, 2147483648
        %v1362 = vor.u32 1.1754944e-38, %v1361
        %v1363 = vsel %vm1360, %v1362, %v1358
        %v1364 = vmul.f32 1.0, %v1363
        %v1365 = vrcp.pop %v1277
        %v1366 = vmul.f32 %v1277, %v1365
        %v1367 = vsub.f32 1.0, %v1366
        %v1368 = vmul.f32 %v1365, %v1367
        %v1369 = vadd.f32 %v1365, %v1368
        %vm1370 = vweird.f32 %v1277
        %vm1371 = vweird.f32 %v1365
        %vm1372 = vmor %vm1370, %vm1371
        %v1373 = vsel %vm1372, %v1365, %v1369
        %v1374 = vand.u32 2147483647, %v1277
        %vm1375 = vcmp.eq.f32.partialorder %v1374, 8.507059e+37
        %v1376 = vand.u32 %v1277, 2147483648
        %v1377 = vor.u32 1.1754944e-38, %v1376
        %v1378 = vsel %vm1375, %v1377, %v1373
        %v1379 = vmul.f32 1.0, %v1378
        %v1380 = vrcp.pop %v1278
        %v1381 = vmul.f32 %v1278, %v1380
        %v1382 = vsub.f32 1.0, %v1381
        %v1383 = vmul.f32 %v1380, %v1382
        %v1384 = vadd.f32 %v1380, %v1383
        %vm1385 = vweird.f32 %v1278
        %vm1386 = vweird.f32 %v1380
        %vm1387 = vmor %vm1385, %vm1386
        %v1388 = vsel %vm1387, %v1380, %v1384
        %v1389 = vand.u32 2147483647, %v1278
        %vm1390 = vcmp.eq.f32.partialorder %v1389, 8.507059e+37
        %v1391 = vand.u32 %v1278, 2147483648
        %v1392 = vor.u32 1.1754944e-38, %v1391
        %v1393 = vsel %vm1390, %v1392, %v1388
        %v1394 = vmul.f32 1.0, %v1393
        %v1395 = vrcp.pop %v1279
        %v1396 = vmul.f32 %v1279, %v1395
        %v1397 = vsub.f32 1.0, %v1396
        %v1398 = vmul.f32 %v1395, %v1397
        %v1399 = vadd.f32 %v1395, %v1398
        %vm1400 = vweird.f32 %v1279
        %vm1401 = vweird.f32 %v1395
        %vm1402 = vmor %vm1400, %vm1401
        %v1403 = vsel %vm1402, %v1395, %v1399
        %v1404 = vand.u32 2147483647, %v1279
        %vm1405 = vcmp.eq.f32.partialorder %v1404, 8.507059e+37
        %v1406 = vand.u32 %v1279, 2147483648
        %v1407 = vor.u32 1.1754944e-38, %v1406
        %v1408 = vsel %vm1405, %v1407, %v1403
        %v1409 = vmul.f32 1.0, %v1408
        %v1410 = vrcp.pop %v1280
        %v1411 = vmul.f32 %v1280, %v1410
        %v1412 = vsub.f32 1.0, %v1411
        %v1413 = vmul.f32 %v1410, %v1412
        %v1414 = vadd.f32 %v1410, %v1413
        %vm1415 = vweird.f32 %v1280
        %vm1416 = vweird.f32 %v1410
        %vm1417 = vmor %vm1415, %vm1416
        %v1418 = vsel %vm1417, %v1410, %v1414
        %v1419 = vand.u32 2147483647, %v1280
        %vm1420 = vcmp.eq.f32.partialorder %v1419, 8.507059e+37
        %v1421 = vand.u32 %v1280, 2147483648
        %v1422 = vor.u32 1.1754944e-38, %v1421
        %v1423 = vsel %vm1420, %v1422, %v1418
        %v1424 = vmul.f32 1.0, %v1423
        %v1425 = vrcp.pop %v1281
        %v1426 = vmul.f32 %v1281, %v1425
        %v1427 = vsub.f32 1.0, %v1426
        %v1428 = vmul.f32 %v1425, %v1427
        %v1429 = vadd.f32 %v1425, %v1428
        %vm1430 = vweird.f32 %v1281
        %vm1431 = vweird.f32 %v1425
        %vm1432 = vmor %vm1430, %vm1431
        %v1433 = vsel %vm1432, %v1425, %v1429
        %v1434 = vand.u32 2147483647, %v1281
        %vm1435 = vcmp.eq.f32.partialorder %v1434, 8.507059e+37
        %v1436 = vand.u32 %v1281, 2147483648
        %v1437 = vor.u32 1.1754944e-38, %v1436
        %v1438 = vsel %vm1435, %v1437, %v1433
        %v1439 = vmul.f32 1.0, %v1438
        %v1440 = vrcp.pop %v1282
        %v1441 = vmul.f32 %v1282, %v1440
        %v1442 = vsub.f32 1.0, %v1441
        %v1443 = vmul.f32 %v1440, %v1442
        %v1444 = vadd.f32 %v1440, %v1443
        %vm1445 = vweird.f32 %v1282
        %vm1446 = vweird.f32 %v1440
        %vm1447 = vmor %vm1445, %vm1446
        %v1448 = vsel %vm1447, %v1440, %v1444
        %v1449 = vand.u32 2147483647, %v1282
        %vm1450 = vcmp.eq.f32.partialorder %v1449, 8.507059e+37
        %v1451 = vand.u32 %v1282, 2147483648
        %v1452 = vor.u32 1.1754944e-38, %v1451
        %v1453 = vsel %vm1450, %v1452, %v1448
        %v1454 = vmul.f32 1.0, %v1453
        %v1455 = vrcp.pop %v1283
        %v1456 = vmul.f32 %v1283, %v1455
        %v1457 = vsub.f32 1.0, %v1456
        %v1458 = vmul.f32 %v1455, %v1457
        %v1459 = vadd.f32 %v1455, %v1458
        %vm1460 = vweird.f32 %v1283
        %vm1461 = vweird.f32 %v1455
        %vm1462 = vmor %vm1460, %vm1461
        %v1463 = vsel %vm1462, %v1455, %v1459
        %v1464 = vand.u32 2147483647, %v1283
        %vm1465 = vcmp.eq.f32.partialorder %v1464, 8.507059e+37
        %v1466 = vand.u32 %v1283, 2147483648
        %v1467 = vor.u32 1.1754944e-38, %v1466
        %v1468 = vsel %vm1465, %v1467, %v1463
        %v1469 = vmul.f32 1.0, %v1468
        %v1470 = vrcp.pop %v1284
        %v1471 = vmul.f32 %v1284, %v1470
        %v1472 = vsub.f32 1.0, %v1471
        %v1473 = vmul.f32 %v1470, %v1472
        %v1474 = vadd.f32 %v1470, %v1473
        %vm1475 = vweird.f32 %v1284
        %vm1476 = vweird.f32 %v1470
        %vm1477 = vmor %vm1475, %vm1476
        %v1478 = vsel %vm1477, %v1470, %v1474
        %v1479 = vand.u32 2147483647, %v1284
        %vm1480 = vcmp.eq.f32.partialorder %v1479, 8.507059e+37
        %v1481 = vand.u32 %v1284, 2147483648
        %v1482 = vor.u32 1.1754944e-38, %v1481
        %v1483 = vsel %vm1480, %v1482, %v1478
        %v1484 = vmul.f32 1.0, %v1483
        %v1485 = vrcp.pop %v1285
        %v1486 = vmul.f32 %v1285, %v1485
        %v1487 = vsub.f32 1.0, %v1486
        %v1488 = vmul.f32 %v1485, %v1487
        %v1489 = vadd.f32 %v1485, %v1488
        %vm1490 = vweird.f32 %v1285
        %vm1491 = vweird.f32 %v1485
        %vm1492 = vmor %vm1490, %vm1491
        %v1493 = vsel %vm1492, %v1485, %v1489
        %v1494 = vand.u32 2147483647, %v1285
        %vm1495 = vcmp.eq.f32.partialorder %v1494, 8.507059e+37
        %v1496 = vand.u32 %v1285, 2147483648
        %v1497 = vor.u32 1.1754944e-38, %v1496
        %v1498 = vsel %vm1495, %v1497, %v1493
        %v1499 = vmul.f32 1.0, %v1498
        %v1500 = vrcp.pop %v1286
        %v1501 = vmul.f32 %v1286, %v1500
        %v1502 = vsub.f32 1.0, %v1501
        %v1503 = vmul.f32 %v1500, %v1502
        %v1504 = vadd.f32 %v1500, %v1503
        %vm1505 = vweird.f32 %v1286
        %vm1506 = vweird.f32 %v1500
        %vm1507 = vmor %vm1505, %vm1506
        %v1508 = vsel %vm1507, %v1500, %v1504
        %v1509 = vand.u32 2147483647, %v1286
        %vm1510 = vcmp.eq.f32.partialorder %v1509, 8.507059e+37
        %v1511 = vand.u32 %v1286, 2147483648
        %v1512 = vor.u32 1.1754944e-38, %v1511
        %v1513 = vsel %vm1510, %v1512, %v1508
        %v1514 = vmul.f32 1.0, %v1513
        %v1515 = vrcp.pop %v1287
        %v1516 = vmul.f32 %v1287, %v1515
        %v1517 = vsub.f32 1.0, %v1516
        %v1518 = vmul.f32 %v1515, %v1517
        %v1519 = vadd.f32 %v1515, %v1518
        %vm1520 = vweird.f32 %v1287
        %vm1521 = vweird.f32 %v1515
        %vm1522 = vmor %vm1520, %vm1521
        %v1523 = vsel %vm1522, %v1515, %v1519
        %v1524 = vand.u32 2147483647, %v1287
        %vm1525 = vcmp.eq.f32.partialorder %v1524, 8.507059e+37
        %v1526 = vand.u32 %v1287, 2147483648
        %v1527 = vor.u32 1.1754944e-38, %v1526
        %v1528 = vsel %vm1525, %v1527, %v1523
        %v1529 = vmul.f32 1.0, %v1528
        %v1530 = vrcp.pop %v1288
        %v1531 = vmul.f32 %v1288, %v1530
        %v1532 = vsub.f32 1.0, %v1531
        %v1533 = vmul.f32 %v1530, %v1532
        %v1534 = vadd.f32 %v1530, %v1533
        %vm1535 = vweird.f32 %v1288
        %vm1536 = vweird.f32 %v1530
        %vm1537 = vmor %vm1535, %vm1536
        %v1538 = vsel %vm1537, %v1530, %v1534
        %v1539 = vand.u32 2147483647, %v1288
        %vm1540 = vcmp.eq.f32.partialorder %v1539, 8.507059e+37
        %v1541 = vand.u32 %v1288, 2147483648
        %v1542 = vor.u32 1.1754944e-38, %v1541
        %v1543 = vsel %vm1540, %v1542, %v1538
        %v1544 = vmul.f32 1.0, %v1543
        %v1545 = vrcp.pop %v1289
        %v1546 = vmul.f32 %v1289, %v1545
        %v1547 = vsub.f32 1.0, %v1546
        %v1548 = vmul.f32 %v1545, %v1547
        %v1549 = vadd.f32 %v1545, %v1548
        %vm1550 = vweird.f32 %v1289
        %vm1551 = vweird.f32 %v1545
        %vm1552 = vmor %vm1550, %vm1551
        %v1553 = vsel %vm1552, %v1545, %v1549
        %v1554 = vand.u32 2147483647, %v1289
        %vm1555 = vcmp.eq.f32.partialorder %v1554, 8.507059e+37
        %v1556 = vand.u32 %v1289, 2147483648
        %v1557 = vor.u32 1.1754944e-38, %v1556
        %v1558 = vsel %vm1555, %v1557, %v1553
        %v1559 = vmul.f32 1.0, %v1558
        %v1560 = vrcp.pop %v1290
        %v1561 = vmul.f32 %v1290, %v1560
        %v1562 = vsub.f32 1.0, %v1561
        %v1563 = vmul.f32 %v1560, %v1562
        %v1564 = vadd.f32 %v1560, %v1563
        %vm1565 = vweird.f32 %v1290
        %vm1566 = vweird.f32 %v1560
        %vm1567 = vmor %vm1565, %vm1566
        %v1568 = vsel %vm1567, %v1560, %v1564
        %v1569 = vand.u32 2147483647, %v1290
        %vm1570 = vcmp.eq.f32.partialorder %v1569, 8.507059e+37
        %v1571 = vand.u32 %v1290, 2147483648
        %v1572 = vor.u32 1.1754944e-38, %v1571
        %v1573 = vsel %vm1570, %v1572, %v1568
        %v1574 = vmul.f32 1.0, %v1573
        %v1575 = vrcp.pop %v1291
        %v1576 = vmul.f32 %v1291, %v1575
        %v1577 = vsub.f32 1.0, %v1576
        %v1578 = vmul.f32 %v1575, %v1577
        %v1579 = vadd.f32 %v1575, %v1578
        %vm1580 = vweird.f32 %v1291
        %vm1581 = vweird.f32 %v1575
        %vm1582 = vmor %vm1580, %vm1581
        %v1583 = vsel %vm1582, %v1575, %v1579
        %v1584 = vand.u32 2147483647, %v1291
        %vm1585 = vcmp.eq.f32.partialorder %v1584, 8.507059e+37
        %v1586 = vand.u32 %v1291, 2147483648
        %v1587 = vor.u32 1.1754944e-38, %v1586
        %v1588 = vsel %vm1585, %v1587, %v1583
        %v1589 = vmul.f32 1.0, %v1588
        %v1590 = vrcp.pop %v1292
        %v1591 = vmul.f32 %v1292, %v1590
        %v1592 = vsub.f32 1.0, %v1591
        %v1593 = vmul.f32 %v1590, %v1592
        %v1594 = vadd.f32 %v1590, %v1593
        %vm1595 = vweird.f32 %v1292
        %vm1596 = vweird.f32 %v1590
        %vm1597 = vmor %vm1595, %vm1596
        %v1598 = vsel %vm1597, %v1590, %v1594
        %v1599 = vand.u32 2147483647, %v1292
        %vm1600 = vcmp.eq.f32.partialorder %v1599, 8.507059e+37
        %v1601 = vand.u32 %v1292, 2147483648
        %v1602 = vor.u32 1.1754944e-38, %v1601
        %v1603 = vsel %vm1600, %v1602, %v1598
        %v1604 = vmul.f32 1.0, %v1603
        %v1605 = vrcp.pop %v1293
        %v1606 = vmul.f32 %v1293, %v1605
        %v1607 = vsub.f32 1.0, %v1606
        %v1608 = vmul.f32 %v1605, %v1607
        %v1609 = vadd.f32 %v1605, %v1608
        %vm1610 = vweird.f32 %v1293
        %vm1611 = vweird.f32 %v1605
        %vm1612 = vmor %vm1610, %vm1611
        %v1613 = vsel %vm1612, %v1605, %v1609
        %v1614 = vand.u32 2147483647, %v1293
        %vm1615 = vcmp.eq.f32.partialorder %v1614, 8.507059e+37
        %v1616 = vand.u32 %v1293, 2147483648
        %v1617 = vor.u32 1.1754944e-38, %v1616
        %v1618 = vsel %vm1615, %v1617, %v1613
        %v1619 = vmul.f32 1.0, %v1618
        %v1620 = vrcp.pop %v1294
        %v1621 = vmul.f32 %v1294, %v1620
        %v1622 = vsub.f32 1.0, %v1621
        %v1623 = vmul.f32 %v1620, %v1622
        %v1624 = vadd.f32 %v1620, %v1623
        %vm1625 = vweird.f32 %v1294
        %vm1626 = vweird.f32 %v1620
        %vm1627 = vmor %vm1625, %vm1626
        %v1628 = vsel %vm1627, %v1620, %v1624
        %v1629 = vand.u32 2147483647, %v1294
        %vm1630 = vcmp.eq.f32.partialorder %v1629, 8.507059e+37
        %v1631 = vand.u32 %v1294, 2147483648
        %v1632 = vor.u32 1.1754944e-38, %v1631
        %v1633 = vsel %vm1630, %v1632, %v1628
        %v1634 = vmul.f32 1.0, %v1633
        %v1635 = vrcp.pop %v1295
        %v1636 = vmul.f32 %v1295, %v1635
        %v1637 = vsub.f32 1.0, %v1636
        %v1638 = vmul.f32 %v1635, %v1637
        %v1639 = vadd.f32 %v1635, %v1638
        %vm1640 = vweird.f32 %v1295
        %vm1641 = vweird.f32 %v1635
        %vm1642 = vmor %vm1640, %vm1641
        %v1643 = vsel %vm1642, %v1635, %v1639
        %v1644 = vand.u32 2147483647, %v1295
        %vm1645 = vcmp.eq.f32.partialorder %v1644, 8.507059e+37
        %v1646 = vand.u32 %v1295, 2147483648
        %v1647 = vor.u32 1.1754944e-38, %v1646
        %v1648 = vsel %vm1645, %v1647, %v1643
        %v1649 = vmul.f32 1.0, %v1648
        %v1650 = vrcp.pop %v1296
        %v1651 = vmul.f32 %v1296, %v1650
        %v1652 = vsub.f32 1.0, %v1651
        %v1653 = vmul.f32 %v1650, %v1652
        %v1654 = vadd.f32 %v1650, %v1653
        %vm1655 = vweird.f32 %v1296
        %vm1656 = vweird.f32 %v1650
        %vm1657 = vmor %vm1655, %vm1656
        %v1658 = vsel %vm1657, %v1650, %v1654
        %v1659 = vand.u32 2147483647, %v1296
        %vm1660 = vcmp.eq.f32.partialorder %v1659, 8.507059e+37
        %v1661 = vand.u32 %v1296, 2147483648
        %v1662 = vor.u32 1.1754944e-38, %v1661
        %v1663 = vsel %vm1660, %v1662, %v1658
        %v1664 = vmul.f32 1.0, %v1663
        %v1665 = vrcp.pop %v1297
        %v1666 = vmul.f32 %v1297, %v1665
        %v1667 = vsub.f32 1.0, %v1666
        %v1668 = vmul.f32 %v1665, %v1667
        %v1669 = vadd.f32 %v1665, %v1668
        %vm1670 = vweird.f32 %v1297
        %vm1671 = vweird.f32 %v1665
        %vm1672 = vmor %vm1670, %vm1671
        %v1673 = vsel %vm1672, %v1665, %v1669
        %v1674 = vand.u32 2147483647, %v1297
        %vm1675 = vcmp.eq.f32.partialorder %v1674, 8.507059e+37
        %v1676 = vand.u32 %v1297, 2147483648
        %v1677 = vor.u32 1.1754944e-38, %v1676
        %v1678 = vsel %vm1675, %v1677, %v1673
        %v1679 = vmul.f32 1.0, %v1678
        %v1680 = vrcp.pop %v1298
        %v1681 = vmul.f32 %v1298, %v1680
        %v1682 = vsub.f32 1.0, %v1681
        %v1683 = vmul.f32 %v1680, %v1682
        %v1684 = vadd.f32 %v1680, %v1683
        %vm1685 = vweird.f32 %v1298
        %vm1686 = vweird.f32 %v1680
        %vm1687 = vmor %vm1685, %vm1686
        %v1688 = vsel %vm1687, %v1680, %v1684
        %v1689 = vand.u32 2147483647, %v1298
        %vm1690 = vcmp.eq.f32.partialorder %v1689, 8.507059e+37
        %v1691 = vand.u32 %v1298, 2147483648
        %v1692 = vor.u32 1.1754944e-38, %v1691
        %v1693 = vsel %vm1690, %v1692, %v1688
        %v1694 = vmul.f32 1.0, %v1693
        %v1695 = vrcp.pop %v1299
        %v1696 = vmul.f32 %v1299, %v1695
        %v1697 = vsub.f32 1.0, %v1696
        %v1698 = vmul.f32 %v1695, %v1697
        %v1699 = vadd.f32 %v1695, %v1698
        %vm1700 = vweird.f32 %v1299
        %vm1701 = vweird.f32 %v1695
        %vm1702 = vmor %vm1700, %vm1701
        %v1703 = vsel %vm1702, %v1695, %v1699
        %v1704 = vand.u32 2147483647, %v1299
        %vm1705 = vcmp.eq.f32.partialorder %v1704, 8.507059e+37
        %v1706 = vand.u32 %v1299, 2147483648
        %v1707 = vor.u32 1.1754944e-38, %v1706
        %v1708 = vsel %vm1705, %v1707, %v1703
        %v1709 = vmul.f32 1.0, %v1708
        %v1710 = vrcp.pop %v1300
        %v1711 = vmul.f32 %v1300, %v1710
        %v1712 = vsub.f32 1.0, %v1711
        %v1713 = vmul.f32 %v1710, %v1712
        %v1714 = vadd.f32 %v1710, %v1713
        %vm1715 = vweird.f32 %v1300
        %vm1716 = vweird.f32 %v1710
        %vm1717 = vmor %vm1715, %vm1716
        %v1718 = vsel %vm1717, %v1710, %v1714
        %v1719 = vand.u32 2147483647, %v1300
        %vm1720 = vcmp.eq.f32.partialorder %v1719, 8.507059e+37
        %v1721 = vand.u32 %v1300, 2147483648
        %v1722 = vor.u32 1.1754944e-38, %v1721
        %v1723 = vsel %vm1720, %v1722, %v1718
        %v1724 = vmul.f32 1.0, %v1723
        %v1725 = vrcp.pop %v1301
        %v1726 = vmul.f32 %v1301, %v1725
        %v1727 = vsub.f32 1.0, %v1726
        %v1728 = vmul.f32 %v1725, %v1727
        %v1729 = vadd.f32 %v1725, %v1728
        %vm1730 = vweird.f32 %v1301
        %vm1731 = vweird.f32 %v1725
        %vm1732 = vmor %vm1730, %vm1731
        %v1733 = vsel %vm1732, %v1725, %v1729
        %v1734 = vand.u32 2147483647, %v1301
        %vm1735 = vcmp.eq.f32.partialorder %v1734, 8.507059e+37
        %v1736 = vand.u32 %v1301, 2147483648
        %v1737 = vor.u32 1.1754944e-38, %v1736
        %v1738 = vsel %vm1735, %v1737, %v1733
        %v1739 = vmul.f32 1.0, %v1738
        %v1740 = vrcp.pop %v1302
        %v1741 = vmul.f32 %v1302, %v1740
        %v1742 = vsub.f32 1.0, %v1741
        %v1743 = vmul.f32 %v1740, %v1742
        %v1744 = vadd.f32 %v1740, %v1743
        %vm1745 = vweird.f32 %v1302
        %vm1746 = vweird.f32 %v1740
        %vm1747 = vmor %vm1745, %vm1746
        %v1748 = vsel %vm1747, %v1740, %v1744
        %v1749 = vand.u32 2147483647, %v1302
        %vm1750 = vcmp.eq.f32.partialorder %v1749, 8.507059e+37
        %v1751 = vand.u32 %v1302, 2147483648
        %v1752 = vor.u32 1.1754944e-38, %v1751
        %v1753 = vsel %vm1750, %v1752, %v1748
        %v1754 = vmul.f32 1.0, %v1753
        %v1755 = vrcp.pop %v1303
        %v1756 = vmul.f32 %v1303, %v1755
        %v1757 = vsub.f32 1.0, %v1756
        %v1758 = vmul.f32 %v1755, %v1757
        %v1759 = vadd.f32 %v1755, %v1758
        %vm1760 = vweird.f32 %v1303
        %vm1761 = vweird.f32 %v1755
        %vm1762 = vmor %vm1760, %vm1761
        %v1763 = vsel %vm1762, %v1755, %v1759
        %v1764 = vand.u32 2147483647, %v1303
        %vm1765 = vcmp.eq.f32.partialorder %v1764, 8.507059e+37
        %v1766 = vand.u32 %v1303, 2147483648
        %v1767 = vor.u32 1.1754944e-38, %v1766
        %v1768 = vsel %vm1765, %v1767, %v1763
        %v1769 = vmul.f32 1.0, %v1768
        %v1770 = vrcp.pop %v1304
        %v1771 = vmul.f32 %v1304, %v1770
        %v1772 = vsub.f32 1.0, %v1771
        %v1773 = vmul.f32 %v1770, %v1772
        %v1774 = vadd.f32 %v1770, %v1773
        %vm1775 = vweird.f32 %v1304
        %vm1776 = vweird.f32 %v1770
        %vm1777 = vmor %vm1775, %vm1776
        %v1778 = vsel %vm1777, %v1770, %v1774
        %v1779 = vand.u32 2147483647, %v1304
        %vm1780 = vcmp.eq.f32.partialorder %v1779, 8.507059e+37
        %v1781 = vand.u32 %v1304, 2147483648
        %v1782 = vor.u32 1.1754944e-38, %v1781
        %v1783 = vsel %vm1780, %v1782, %v1778
        %v1784 = vmul.f32 1.0, %v1783
        %v1785 = vmul.f32 %v984, %v1319
        %v1786 = vmul.f32 %v1042, %v1334
        %v1787 = vmul.f32 %v1100, %v1349
        %v1788 = vmul.f32 %v1158, %v1364
        %v1789 = vmul.f32 %v986, %v1379
        %v1790 = vmul.f32 %v1044, %v1394
        %v1791 = vmul.f32 %v1102, %v1409
        %v1792 = vmul.f32 %v1160, %v1424
        %v1793 = vmul.f32 %v989, %v1439
        %v1794 = vmul.f32 %v1047, %v1454
        %v1795 = vmul.f32 %v1105, %v1469
        %v1796 = vmul.f32 %v1163, %v1484
        %v1797 = vmul.f32 %v991, %v1499
        %v1798 = vmul.f32 %v1049, %v1514
        %v1799 = vmul.f32 %v1107, %v1529
        %v1800 = vmul.f32 %v1165, %v1544
        %v1801 = vmul.f32 %v994, %v1559
        %v1802 = vmul.f32 %v1052, %v1574
        %v1803 = vmul.f32 %v1110, %v1589
        %v1804 = vmul.f32 %v1168, %v1604
        %v1805 = vmul.f32 %v996, %v1619
        %v1806 = vmul.f32 %v1054, %v1634
        %v1807 = vmul.f32 %v1112, %v1649
        %v1808 = vmul.f32 %v1170, %v1664
        %v1809 = vmul.f32 %v999, %v1679
        %v1810 = vmul.f32 %v1057, %v1694
        %v1811 = vmul.f32 %v1115, %v1709
        %v1812 = vmul.f32 %v1173, %v1724
        %v1813 = vmul.f32 %v1001, %v1739
        %v1814 = vmul.f32 %v1059, %v1754
        %v1815 = vmul.f32 %v1117, %v1769
        %v1816 = vmul.f32 %v1175, %v1784
        %v1817 = vpack.c.bf16 %v1789, %v1785
        %v1818 = vpack.c.bf16 %v1790, %v1786
        %v1819 = vpack.c.bf16 %v1791, %v1787
        %v1820 = vpack.c.bf16 %v1792, %v1788
        %v1821 = vpack.c.bf16 %v1797, %v1793
        %v1822 = vpack.c.bf16 %v1798, %v1794
        %v1823 = vpack.c.bf16 %v1799, %v1795
        %v1824 = vpack.c.bf16 %v1800, %v1796
        %v1825 = vpack.c.bf16 %v1805, %v1801
        %v1826 = vpack.c.bf16 %v1806, %v1802
        %v1827 = vpack.c.bf16 %v1807, %v1803
        %v1828 = vpack.c.bf16 %v1808, %v1804
        %v1829 = vpack.c.bf16 %v1813, %v1809
        %v1830 = vpack.c.bf16 %v1814, %v1810
        %v1831 = vpack.c.bf16 %v1815, %v1811
        %v1832 = vpack.c.bf16 %v1816, %v1812
        %v1833 = vld [vmem:[#allocation8] sm:$0xff]
        %v1834 = vld [vmem:[#allocation8 + $0x8] sm:$0xff]
        %v1835 = vld [vmem:[#allocation8 + $0x10] sm:$0xff]
        %v1836 = vld [vmem:[#allocation8 + $0x18] sm:$0xff]
        %v1837 = vld [vmem:[#allocation8 + $0x20] sm:$0xff]
        %v1838 = vld [vmem:[#allocation8 + $0x28] sm:$0xff]
        %v1839 = vld [vmem:[#allocation8 + $0x30] sm:$0xff]
        %v1840 = vld [vmem:[#allocation8 + $0x38] sm:$0xff]
        %v1841 = vld [vmem:[#allocation8 + $0x40] sm:$0xff]
        %v1842 = vld [vmem:[#allocation8 + $0x48] sm:$0xff]
        %v1843 = vld [vmem:[#allocation8 + $0x50] sm:$0xff]
        %v1844 = vld [vmem:[#allocation8 + $0x58] sm:$0xff]
        %v1845 = vld [vmem:[#allocation8 + $0x60] sm:$0xff]
        %v1846 = vld [vmem:[#allocation8 + $0x68] sm:$0xff]
        %v1847 = vld [vmem:[#allocation8 + $0x70] sm:$0xff]
        %v1848 = vld [vmem:[#allocation8 + $0x78] sm:$0xff]
        %v1849 = vld [vmem:[#allocation8 + $0x80] sm:$0xff]
        %v1850 = vld [vmem:[#allocation8 + $0x88] sm:$0xff]
        %v1851 = vld [vmem:[#allocation8 + $0x90] sm:$0xff]
        %v1852 = vld [vmem:[#allocation8 + $0x98] sm:$0xff]
        %v1853 = vld [vmem:[#allocation8 + $0xa0] sm:$0xff]
        %v1854 = vld [vmem:[#allocation8 + $0xa8] sm:$0xff]
        %v1855 = vld [vmem:[#allocation8 + $0xb0] sm:$0xff]
        %v1856 = vld [vmem:[#allocation8 + $0xb8] sm:$0xff]
        %v1857 = vld [vmem:[#allocation8 + $0xc0] sm:$0xff]
        %v1858 = vld [vmem:[#allocation8 + $0xc8] sm:$0xff]
        %v1859 = vld [vmem:[#allocation8 + $0xd0] sm:$0xff]
        %v1860 = vld [vmem:[#allocation8 + $0xd8] sm:$0xff]
        %v1861 = vld [vmem:[#allocation8 + $0xe0] sm:$0xff]
        %v1862 = vld [vmem:[#allocation8 + $0xe8] sm:$0xff]
        %v1863 = vld [vmem:[#allocation8 + $0xf0] sm:$0xff]
        %v1864 = vld [vmem:[#allocation8 + $0xf8] sm:$0xff]
        %v1865 = vld [vmem:[#allocation8 + $0x100] sm:$0xff]
        %v1866 = vld [vmem:[#allocation8 + $0x108] sm:$0xff]
        %v1867 = vld [vmem:[#allocation8 + $0x110] sm:$0xff]
        %v1868 = vld [vmem:[#allocation8 + $0x118] sm:$0xff]
        %v1869 = vld [vmem:[#allocation8 + $0x120] sm:$0xff]
        %v1870 = vld [vmem:[#allocation8 + $0x128] sm:$0xff]
        %v1871 = vld [vmem:[#allocation8 + $0x130] sm:$0xff]
        %v1872 = vld [vmem:[#allocation8 + $0x138] sm:$0xff]
        %v1873 = vld [vmem:[#allocation8 + $0x140] sm:$0xff]
        %v1874 = vld [vmem:[#allocation8 + $0x148] sm:$0xff]
        %v1875 = vld [vmem:[#allocation8 + $0x150] sm:$0xff]
        %v1876 = vld [vmem:[#allocation8 + $0x158] sm:$0xff]
        %v1877 = vld [vmem:[#allocation8 + $0x160] sm:$0xff]
        %v1878 = vld [vmem:[#allocation8 + $0x168] sm:$0xff]
        %v1879 = vld [vmem:[#allocation8 + $0x170] sm:$0xff]
        %v1880 = vld [vmem:[#allocation8 + $0x178] sm:$0xff]
        %v1881 = vld [vmem:[#allocation8 + $0x180] sm:$0xff]
        %v1882 = vld [vmem:[#allocation8 + $0x188] sm:$0xff]
        %v1883 = vld [vmem:[#allocation8 + $0x190] sm:$0xff]
        %v1884 = vld [vmem:[#allocation8 + $0x198] sm:$0xff]
        %v1885 = vld [vmem:[#allocation8 + $0x1a0] sm:$0xff]
        %v1886 = vld [vmem:[#allocation8 + $0x1a8] sm:$0xff]
        %v1887 = vld [vmem:[#allocation8 + $0x1b0] sm:$0xff]
        %v1888 = vld [vmem:[#allocation8 + $0x1b8] sm:$0xff]
        %v1889 = vld [vmem:[#allocation8 + $0x1c0] sm:$0xff]
        %v1890 = vld [vmem:[#allocation8 + $0x1c8] sm:$0xff]
        %v1891 = vld [vmem:[#allocation8 + $0x1d0] sm:$0xff]
        %v1892 = vld [vmem:[#allocation8 + $0x1d8] sm:$0xff]
        %v1893 = vld [vmem:[#allocation8 + $0x1e0] sm:$0xff]
        %v1894 = vld [vmem:[#allocation8 + $0x1e8] sm:$0xff]
        %v1895 = vld [vmem:[#allocation8 + $0x1f0] sm:$0xff]
        %v1896 = vld [vmem:[#allocation8 + $0x1f8] sm:$0xff]
        %v1897 = vld [vmem:[%s4] sm:$0x3]
        %v1899 = vperm.slane %v1897, 0
        %v1900 = vperm.slane %v1897, 1
        %v1967 = vunpack.c.l.b16 %v1833
        %v1968 = vunpack.c.h.b16 %v1833
        %v1969 = vunpack.c.l.b16 %v1834
        %v1970 = vunpack.c.h.b16 %v1834
        %v1971 = vunpack.c.l.b16 %v1835
        %v1972 = vunpack.c.h.b16 %v1835
        %v1973 = vunpack.c.l.b16 %v1836
        %v1974 = vunpack.c.h.b16 %v1836
        %v1975 = vunpack.c.l.b16 %v1837
        %v1976 = vunpack.c.h.b16 %v1837
        %v1977 = vunpack.c.l.b16 %v1838
        %v1978 = vunpack.c.h.b16 %v1838
        %v1979 = vunpack.c.l.b16 %v1839
        %v1980 = vunpack.c.h.b16 %v1839
        %v1981 = vunpack.c.l.b16 %v1840
        %v1982 = vunpack.c.h.b16 %v1840
        %v1983 = vunpack.c.l.b16 %v1841
        %v1984 = vunpack.c.h.b16 %v1841
        %v1985 = vunpack.c.l.b16 %v1842
        %v1986 = vunpack.c.h.b16 %v1842
        %v1987 = vunpack.c.l.b16 %v1843
        %v1988 = vunpack.c.h.b16 %v1843
        %v1989 = vunpack.c.l.b16 %v1844
        %v1990 = vunpack.c.h.b16 %v1844
        %v1991 = vunpack.c.l.b16 %v1845
        %v1992 = vunpack.c.h.b16 %v1845
        %v1993 = vunpack.c.l.b16 %v1846
        %v1994 = vunpack.c.h.b16 %v1846
        %v1995 = vunpack.c.l.b16 %v1847
        %v1996 = vunpack.c.h.b16 %v1847
        %v1997 = vunpack.c.l.b16 %v1848
        %v1998 = vunpack.c.h.b16 %v1848
        %v1999 = vunpack.c.l.b16 %v1849
        %v2000 = vunpack.c.h.b16 %v1849
        %v2001 = vunpack.c.l.b16 %v1850
        %v2002 = vunpack.c.h.b16 %v1850
        %v2003 = vunpack.c.l.b16 %v1851
        %v2004 = vunpack.c.h.b16 %v1851
        %v2005 = vunpack.c.l.b16 %v1852
        %v2006 = vunpack.c.h.b16 %v1852
        %v2007 = vunpack.c.l.b16 %v1853
        %v2008 = vunpack.c.h.b16 %v1853
        %v2009 = vunpack.c.l.b16 %v1854
        %v2010 = vunpack.c.h.b16 %v1854
        %v2011 = vunpack.c.l.b16 %v1855
        %v2012 = vunpack.c.h.b16 %v1855
        %v2013 = vunpack.c.l.b16 %v1856
        %v2014 = vunpack.c.h.b16 %v1856
        %v2015 = vunpack.c.l.b16 %v1857
        %v2016 = vunpack.c.h.b16 %v1857
        %v2017 = vunpack.c.l.b16 %v1858
        %v2018 = vunpack.c.h.b16 %v1858
        %v2019 = vunpack.c.l.b16 %v1859
        %v2020 = vunpack.c.h.b16 %v1859
        %v2021 = vunpack.c.l.b16 %v1860
        %v2022 = vunpack.c.h.b16 %v1860
        %v2023 = vunpack.c.l.b16 %v1861
        %v2024 = vunpack.c.h.b16 %v1861
        %v2025 = vunpack.c.l.b16 %v1862
        %v2026 = vunpack.c.h.b16 %v1862
        %v2027 = vunpack.c.l.b16 %v1863
        %v2028 = vunpack.c.h.b16 %v1863
        %v2029 = vunpack.c.l.b16 %v1864
        %v2030 = vunpack.c.h.b16 %v1864
        %v2031 = vunpack.c.l.b16 %v1865
        %v2032 = vunpack.c.h.b16 %v1865
        %v2033 = vunpack.c.l.b16 %v1866
        %v2034 = vunpack.c.h.b16 %v1866
        %v2035 = vunpack.c.l.b16 %v1867
        %v2036 = vunpack.c.h.b16 %v1867
        %v2037 = vunpack.c.l.b16 %v1868
        %v2038 = vunpack.c.h.b16 %v1868
        %v2039 = vunpack.c.l.b16 %v1869
        %v2040 = vunpack.c.h.b16 %v1869
        %v2041 = vunpack.c.l.b16 %v1870
        %v2042 = vunpack.c.h.b16 %v1870
        %v2043 = vunpack.c.l.b16 %v1871
        %v2044 = vunpack.c.h.b16 %v1871
        %v2045 = vunpack.c.l.b16 %v1872
        %v2046 = vunpack.c.h.b16 %v1872
        %v2047 = vunpack.c.l.b16 %v1873
        %v2048 = vunpack.c.h.b16 %v1873
        %v2049 = vunpack.c.l.b16 %v1874
        %v2050 = vunpack.c.h.b16 %v1874
        %v2051 = vunpack.c.l.b16 %v1875
        %v2052 = vunpack.c.h.b16 %v1875
        %v2053 = vunpack.c.l.b16 %v1876
        %v2054 = vunpack.c.h.b16 %v1876
        %v2055 = vunpack.c.l.b16 %v1877
        %v2056 = vunpack.c.h.b16 %v1877
        %v2057 = vunpack.c.l.b16 %v1878
        %v2058 = vunpack.c.h.b16 %v1878
        %v2059 = vunpack.c.l.b16 %v1879
        %v2060 = vunpack.c.h.b16 %v1879
        %v2061 = vunpack.c.l.b16 %v1880
        %v2062 = vunpack.c.h.b16 %v1880
        %v2063 = vunpack.c.l.b16 %v1881
        %v2064 = vunpack.c.h.b16 %v1881
        %v2065 = vunpack.c.l.b16 %v1882
        %v2066 = vunpack.c.h.b16 %v1882
        %v2067 = vunpack.c.l.b16 %v1883
        %v2068 = vunpack.c.h.b16 %v1883
        %v2069 = vunpack.c.l.b16 %v1884
        %v2070 = vunpack.c.h.b16 %v1884
        %v2071 = vunpack.c.l.b16 %v1885
        %v2072 = vunpack.c.h.b16 %v1885
        %v2073 = vunpack.c.l.b16 %v1886
        %v2074 = vunpack.c.h.b16 %v1886
        %v2075 = vunpack.c.l.b16 %v1887
        %v2076 = vunpack.c.h.b16 %v1887
        %v2077 = vunpack.c.l.b16 %v1888
        %v2078 = vunpack.c.h.b16 %v1888
        %v2079 = vunpack.c.l.b16 %v1889
        %v2080 = vunpack.c.h.b16 %v1889
        %v2081 = vunpack.c.l.b16 %v1890
        %v2082 = vunpack.c.h.b16 %v1890
        %v2083 = vunpack.c.l.b16 %v1891
        %v2084 = vunpack.c.h.b16 %v1891
        %v2085 = vunpack.c.l.b16 %v1892
        %v2086 = vunpack.c.h.b16 %v1892
        %v2087 = vunpack.c.l.b16 %v1893
        %v2088 = vunpack.c.h.b16 %v1893
        %v2089 = vunpack.c.l.b16 %v1894
        %v2090 = vunpack.c.h.b16 %v1894
        %v2091 = vunpack.c.l.b16 %v1895
        %v2092 = vunpack.c.h.b16 %v1895
        %v2093 = vunpack.c.l.b16 %v1896
        %v2094 = vunpack.c.h.b16 %v1896
        %v2095 = vpack.c.b16 %v1969, %v1967
        %v2096 = vpack.c.b16 %v1970, %v1968
        %v2097 = vpack.c.b16 %v1973, %v1971
        %v2098 = vpack.c.b16 %v1974, %v1972
        %v2099 = vpack.c.b16 %v1977, %v1975
        %v2100 = vpack.c.b16 %v1978, %v1976
        %v2101 = vpack.c.b16 %v1981, %v1979
        %v2102 = vpack.c.b16 %v1982, %v1980
        %v2103 = vpack.c.b16 %v1985, %v1983
        %v2104 = vpack.c.b16 %v1986, %v1984
        %v2105 = vpack.c.b16 %v1989, %v1987
        %v2106 = vpack.c.b16 %v1990, %v1988
        %v2107 = vpack.c.b16 %v1993, %v1991
        %v2108 = vpack.c.b16 %v1994, %v1992
        %v2109 = vpack.c.b16 %v1997, %v1995
        %v2110 = vpack.c.b16 %v1998, %v1996
        %v2111 = vpack.c.b16 %v2001, %v1999
        %v2112 = vpack.c.b16 %v2002, %v2000
        %v2113 = vpack.c.b16 %v2005, %v2003
        %v2114 = vpack.c.b16 %v2006, %v2004
        %v2115 = vpack.c.b16 %v2009, %v2007
        %v2116 = vpack.c.b16 %v2010, %v2008
        %v2117 = vpack.c.b16 %v2013, %v2011
        %v2118 = vpack.c.b16 %v2014, %v2012
        %v2119 = vpack.c.b16 %v2017, %v2015
        %v2120 = vpack.c.b16 %v2018, %v2016
        %v2121 = vpack.c.b16 %v2021, %v2019
        %v2122 = vpack.c.b16 %v2022, %v2020
        %v2123 = vpack.c.b16 %v2025, %v2023
        %v2124 = vpack.c.b16 %v2026, %v2024
        %v2125 = vpack.c.b16 %v2029, %v2027
        %v2126 = vpack.c.b16 %v2030, %v2028
        %v2127 = vpack.c.b16 %v2033, %v2031
        %v2128 = vpack.c.b16 %v2034, %v2032
        %v2129 = vpack.c.b16 %v2037, %v2035
        %v2130 = vpack.c.b16 %v2038, %v2036
        %v2131 = vpack.c.b16 %v2041, %v2039
        %v2132 = vpack.c.b16 %v2042, %v2040
        %v2133 = vpack.c.b16 %v2045, %v2043
        %v2134 = vpack.c.b16 %v2046, %v2044
        %v2135 = vpack.c.b16 %v2049, %v2047
        %v2136 = vpack.c.b16 %v2050, %v2048
        %v2137 = vpack.c.b16 %v2053, %v2051
        %v2138 = vpack.c.b16 %v2054, %v2052
        %v2139 = vpack.c.b16 %v2057, %v2055
        %v2140 = vpack.c.b16 %v2058, %v2056
        %v2141 = vpack.c.b16 %v2061, %v2059
        %v2142 = vpack.c.b16 %v2062, %v2060
        %v2143 = vpack.c.b16 %v2065, %v2063
        %v2144 = vpack.c.b16 %v2066, %v2064
        %v2145 = vpack.c.b16 %v2069, %v2067
        %v2146 = vpack.c.b16 %v2070, %v2068
        %v2147 = vpack.c.b16 %v2073, %v2071
        %v2148 = vpack.c.b16 %v2074, %v2072
        %v2149 = vpack.c.b16 %v2077, %v2075
        %v2150 = vpack.c.b16 %v2078, %v2076
        %v2151 = vpack.c.b16 %v2081, %v2079
        %v2152 = vpack.c.b16 %v2082, %v2080
        %v2153 = vpack.c.b16 %v2085, %v2083
        %v2154 = vpack.c.b16 %v2086, %v2084
        %v2155 = vpack.c.b16 %v2089, %v2087
        %v2156 = vpack.c.b16 %v2090, %v2088
        %v2157 = vpack.c.b16 %v2093, %v2091
        %v2158 = vpack.c.b16 %v2094, %v2092
        %2223 = vmatpush.bf16.msra.mxu0 %v2109
        %2224 = vmatpush.bf16.msra.mxu0 %v2107
        %2225 = vmatpush.bf16.msra.mxu0 %v2105
        %2226 = vmatpush.bf16.msra.mxu0 %v2103
        %2227 = vmatpush.bf16.msra.mxu0 %v2101
        %2228 = vmatpush.bf16.msra.mxu0 %v2099
        %2229 = vmatpush.bf16.msra.mxu0 %v2097
        %2230 = vmatpush.bf16.msra.mxu0 %v2095
        %2231 = vmatmul.bf16.gmra.mxu0 %v1817
        %v2232 = vpop.f32.mrf.mxu0
        %v2233 = vadd.f32 %v1899, %v2232
        %v2234 = vpop.f32.mrf.mxu0
        %v2235 = vadd.f32 %v1899, %v2234
        %2236 = vmatmul.bf16.gmra.mxu0 %v1821
        %v2237 = vpop.f32.mrf.mxu0
        %v2238 = vadd.f32 %v1899, %v2237
        %v2239 = vpop.f32.mrf.mxu0
        %v2240 = vadd.f32 %v1899, %v2239
        %2241 = vmatmul.bf16.gmra.mxu0 %v1825
        %v2242 = vpop.f32.mrf.mxu0
        %v2243 = vadd.f32 %v1899, %v2242
        %v2244 = vpop.f32.mrf.mxu0
        %v2245 = vadd.f32 %v1899, %v2244
        %2246 = vmatmul.bf16.gmra.mxu0 %v1829
        %v2247 = vpop.f32.mrf.mxu0
        %v2248 = vadd.f32 %v1899, %v2247
        %v2249 = vpop.f32.mrf.mxu0
        %v2250 = vadd.f32 %v1899, %v2249
        %2251 = vdwg.mxu0
        %2252 = vmatpush.bf16.msra.mxu0 %v2125
        %2253 = vmatpush.bf16.msra.mxu0 %v2123
        %2254 = vmatpush.bf16.msra.mxu0 %v2121
        %2255 = vmatpush.bf16.msra.mxu0 %v2119
        %2256 = vmatpush.bf16.msra.mxu0 %v2117
        %2257 = vmatpush.bf16.msra.mxu0 %v2115
        %2258 = vmatpush.bf16.msra.mxu0 %v2113
        %2259 = vmatpush.bf16.msra.mxu0 %v2111
        %2260 = vmatmul.bf16.gmra.mxu0 %v1818
        %v2261 = vpop.f32.mrf.mxu0
        %v2262 = vadd.f32 %v2233, %v2261
        %v2263 = vpop.f32.mrf.mxu0
        %v2264 = vadd.f32 %v2235, %v2263
        %2265 = vmatmul.bf16.gmra.mxu0 %v1822
        %v2266 = vpop.f32.mrf.mxu0
        %v2267 = vadd.f32 %v2238, %v2266
        %v2268 = vpop.f32.mrf.mxu0
        %v2269 = vadd.f32 %v2240, %v2268
        %2270 = vmatmul.bf16.gmra.mxu0 %v1826
        %v2271 = vpop.f32.mrf.mxu0
        %v2272 = vadd.f32 %v2243, %v2271
        %v2273 = vpop.f32.mrf.mxu0
        %v2274 = vadd.f32 %v2245, %v2273
        %2275 = vmatmul.bf16.gmra.mxu0 %v1830
        %v2276 = vpop.f32.mrf.mxu0
        %v2277 = vadd.f32 %v2248, %v2276
        %v2278 = vpop.f32.mrf.mxu0
        %v2279 = vadd.f32 %v2250, %v2278
        %2280 = vdwg.mxu0
        %2281 = vmatpush.bf16.msra.mxu0 %v2141
        %2282 = vmatpush.bf16.msra.mxu0 %v2139
        %2283 = vmatpush.bf16.msra.mxu0 %v2137
        %2284 = vmatpush.bf16.msra.mxu0 %v2135
        %2285 = vmatpush.bf16.msra.mxu0 %v2133
        %2286 = vmatpush.bf16.msra.mxu0 %v2131
        %2287 = vmatpush.bf16.msra.mxu0 %v2129
        %2288 = vmatpush.bf16.msra.mxu0 %v2127
        %2289 = vmatmul.bf16.gmra.mxu0 %v1819
        %v2290 = vpop.f32.mrf.mxu0
        %v2291 = vadd.f32 %v2262, %v2290
        %v2292 = vpop.f32.mrf.mxu0
        %v2293 = vadd.f32 %v2264, %v2292
        %2294 = vmatmul.bf16.gmra.mxu0 %v1823
        %v2295 = vpop.f32.mrf.mxu0
        %v2296 = vadd.f32 %v2267, %v2295
        %v2297 = vpop.f32.mrf.mxu0
        %v2298 = vadd.f32 %v2269, %v2297
        %2299 = vmatmul.bf16.gmra.mxu0 %v1827
        %v2300 = vpop.f32.mrf.mxu0
        %v2301 = vadd.f32 %v2272, %v2300
        %v2302 = vpop.f32.mrf.mxu0
        %v2303 = vadd.f32 %v2274, %v2302
        %2304 = vmatmul.bf16.gmra.mxu0 %v1831
        %v2305 = vpop.f32.mrf.mxu0
        %v2306 = vadd.f32 %v2277, %v2305
        %v2307 = vpop.f32.mrf.mxu0
        %v2308 = vadd.f32 %v2279, %v2307
        %2309 = vdwg.mxu0
        %2310 = vmatpush.bf16.msra.mxu0 %v2157
        %2311 = vmatpush.bf16.msra.mxu0 %v2155
        %2312 = vmatpush.bf16.msra.mxu0 %v2153
        %2313 = vmatpush.bf16.msra.mxu0 %v2151
        %2314 = vmatpush.bf16.msra.mxu0 %v2149
        %2315 = vmatpush.bf16.msra.mxu0 %v2147
        %2316 = vmatpush.bf16.msra.mxu0 %v2145
        %2317 = vmatpush.bf16.msra.mxu0 %v2143
        %2318 = vmatmul.bf16.gmra.mxu0 %v1820
        %v2319 = vpop.f32.mrf.mxu0
        %v2320 = vadd.f32 %v2291, %v2319
        %v2321 = vpop.f32.mrf.mxu0
        %v2322 = vadd.f32 %v2293, %v2321
        %2323 = vmatmul.bf16.gmra.mxu0 %v1824
        %v2324 = vpop.f32.mrf.mxu0
        %v2325 = vadd.f32 %v2296, %v2324
        %v2326 = vpop.f32.mrf.mxu0
        %v2327 = vadd.f32 %v2298, %v2326
        %2328 = vmatmul.bf16.gmra.mxu0 %v1828
        %v2329 = vpop.f32.mrf.mxu0
        %v2330 = vadd.f32 %v2301, %v2329
        %v2331 = vpop.f32.mrf.mxu0
        %v2332 = vadd.f32 %v2303, %v2331
        %2333 = vmatmul.bf16.gmra.mxu0 %v1832
        %v2334 = vpop.f32.mrf.mxu0
        %v2335 = vadd.f32 %v2306, %v2334
        %v2336 = vpop.f32.mrf.mxu0
        %v2337 = vadd.f32 %v2308, %v2336
        %2338 = vdwg.mxu0
        %2339 = vmatpush.bf16.msra.mxu0 %v2110
        %2340 = vmatpush.bf16.msra.mxu0 %v2108
        %2341 = vmatpush.bf16.msra.mxu0 %v2106
        %2342 = vmatpush.bf16.msra.mxu0 %v2104
        %2343 = vmatpush.bf16.msra.mxu0 %v2102
        %2344 = vmatpush.bf16.msra.mxu0 %v2100
        %2345 = vmatpush.bf16.msra.mxu0 %v2098
        %2346 = vmatpush.bf16.msra.mxu0 %v2096
        %2347 = vmatmul.bf16.gmra.mxu0 %v1817
        %v2348 = vpop.f32.mrf.mxu0
        %v2349 = vadd.f32 %v1900, %v2348
        %v2350 = vpop.f32.mrf.mxu0
        %v2351 = vadd.f32 %v1900, %v2350
        %2352 = vmatmul.bf16.gmra.mxu0 %v1821
        %v2353 = vpop.f32.mrf.mxu0
        %v2354 = vadd.f32 %v1900, %v2353
        %v2355 = vpop.f32.mrf.mxu0
        %v2356 = vadd.f32 %v1900, %v2355
        %2357 = vmatmul.bf16.gmra.mxu0 %v1825
        %v2358 = vpop.f32.mrf.mxu0
        %v2359 = vadd.f32 %v1900, %v2358
        %v2360 = vpop.f32.mrf.mxu0
        %v2361 = vadd.f32 %v1900, %v2360
        %2362 = vmatmul.bf16.gmra.mxu0 %v1829
        %v2363 = vpop.f32.mrf.mxu0
        %v2364 = vadd.f32 %v1900, %v2363
        %v2365 = vpop.f32.mrf.mxu0
        %v2366 = vadd.f32 %v1900, %v2365
        %2367 = vdwg.mxu0
        %2368 = vmatpush.bf16.msra.mxu0 %v2126
        %2369 = vmatpush.bf16.msra.mxu0 %v2124
        %2370 = vmatpush.bf16.msra.mxu0 %v2122
        %2371 = vmatpush.bf16.msra.mxu0 %v2120
        %2372 = vmatpush.bf16.msra.mxu0 %v2118
        %2373 = vmatpush.bf16.msra.mxu0 %v2116
        %2374 = vmatpush.bf16.msra.mxu0 %v2114
        %2375 = vmatpush.bf16.msra.mxu0 %v2112
        %2376 = vmatmul.bf16.gmra.mxu0 %v1818
        %v2377 = vpop.f32.mrf.mxu0
        %v2378 = vadd.f32 %v2349, %v2377
        %v2379 = vpop.f32.mrf.mxu0
        %v2380 = vadd.f32 %v2351, %v2379
        %2381 = vmatmul.bf16.gmra.mxu0 %v1822
        %v2382 = vpop.f32.mrf.mxu0
        %v2383 = vadd.f32 %v2354, %v2382
        %v2384 = vpop.f32.mrf.mxu0
        %v2385 = vadd.f32 %v2356, %v2384
        %2386 = vmatmul.bf16.gmra.mxu0 %v1826
        %v2387 = vpop.f32.mrf.mxu0
        %v2388 = vadd.f32 %v2359, %v2387
        %v2389 = vpop.f32.mrf.mxu0
        %v2390 = vadd.f32 %v2361, %v2389
        %2391 = vmatmul.bf16.gmra.mxu0 %v1830
        %v2392 = vpop.f32.mrf.mxu0
        %v2393 = vadd.f32 %v2364, %v2392
        %v2394 = vpop.f32.mrf.mxu0
        %v2395 = vadd.f32 %v2366, %v2394
        %2396 = vdwg.mxu0
        %2397 = vmatpush.bf16.msra.mxu0 %v2142
        %2398 = vmatpush.bf16.msra.mxu0 %v2140
        %2399 = vmatpush.bf16.msra.mxu0 %v2138
        %2400 = vmatpush.bf16.msra.mxu0 %v2136
        %2401 = vmatpush.bf16.msra.mxu0 %v2134
        %2402 = vmatpush.bf16.msra.mxu0 %v2132
        %2403 = vmatpush.bf16.msra.mxu0 %v2130
        %2404 = vmatpush.bf16.msra.mxu0 %v2128
        %2405 = vmatmul.bf16.gmra.mxu0 %v1819
        %v2406 = vpop.f32.mrf.mxu0
        %v2407 = vadd.f32 %v2378, %v2406
        %v2408 = vpop.f32.mrf.mxu0
        %v2409 = vadd.f32 %v2380, %v2408
        %2410 = vmatmul.bf16.gmra.mxu0 %v1823
        %v2411 = vpop.f32.mrf.mxu0
        %v2412 = vadd.f32 %v2383, %v2411
        %v2413 = vpop.f32.mrf.mxu0
        %v2414 = vadd.f32 %v2385, %v2413
        %2415 = vmatmul.bf16.gmra.mxu0 %v1827
        %v2416 = vpop.f32.mrf.mxu0
        %v2417 = vadd.f32 %v2388, %v2416
        %v2418 = vpop.f32.mrf.mxu0
        %v2419 = vadd.f32 %v2390, %v2418
        %2420 = vmatmul.bf16.gmra.mxu0 %v1831
        %v2421 = vpop.f32.mrf.mxu0
        %v2422 = vadd.f32 %v2393, %v2421
        %v2423 = vpop.f32.mrf.mxu0
        %v2424 = vadd.f32 %v2395, %v2423
        %2425 = vdwg.mxu0
        %2426 = vmatpush.bf16.msra.mxu0 %v2158
        %2427 = vmatpush.bf16.msra.mxu0 %v2156
        %2428 = vmatpush.bf16.msra.mxu0 %v2154
        %2429 = vmatpush.bf16.msra.mxu0 %v2152
        %2430 = vmatpush.bf16.msra.mxu0 %v2150
        %2431 = vmatpush.bf16.msra.mxu0 %v2148
        %2432 = vmatpush.bf16.msra.mxu0 %v2146
        %2433 = vmatpush.bf16.msra.mxu0 %v2144
        %2434 = vmatmul.bf16.gmra.mxu0 %v1820
        %v2435 = vpop.f32.mrf.mxu0
        %v2436 = vadd.f32 %v2407, %v2435
        %v2437 = vpop.f32.mrf.mxu0
        %v2438 = vadd.f32 %v2409, %v2437
        %2439 = vmatmul.bf16.gmra.mxu0 %v1824
        %v2440 = vpop.f32.mrf.mxu0
        %v2441 = vadd.f32 %v2412, %v2440
        %v2442 = vpop.f32.mrf.mxu0
        %v2443 = vadd.f32 %v2414, %v2442
        %2444 = vmatmul.bf16.gmra.mxu0 %v1828
        %v2445 = vpop.f32.mrf.mxu0
        %v2446 = vadd.f32 %v2417, %v2445
        %v2447 = vpop.f32.mrf.mxu0
        %v2448 = vadd.f32 %v2419, %v2447
        %2449 = vmatmul.bf16.gmra.mxu0 %v1832
        %v2450 = vpop.f32.mrf.mxu0
        %v2451 = vadd.f32 %v2422, %v2450
        %v2452 = vpop.f32.mrf.mxu0
        %v2453 = vadd.f32 %v2424, %v2452
        %2454 = vdwg.mxu0
        %2455 = vst [vmem:[%s293] sm:$0xff] %v2320
        %2456 = vst [vmem:[%s293 + $0x8] sm:$0xff] %v2436
        %2457 = vst [vmem:[%s293 + $0x10] sm:$0xff] %v2322
        %2458 = vst [vmem:[%s293 + $0x18] sm:$0xff] %v2438
        %2459 = vst [vmem:[%s293 + $0x20] sm:$0xff] %v2325
        %2460 = vst [vmem:[%s293 + $0x28] sm:$0xff] %v2441
        %2461 = vst [vmem:[%s293 + $0x30] sm:$0xff] %v2327
        %2462 = vst [vmem:[%s293 + $0x38] sm:$0xff] %v2443
        %2463 = vst [vmem:[%s293 + $0x40] sm:$0xff] %v2330
        %2464 = vst [vmem:[%s293 + $0x48] sm:$0xff] %v2446
        %2465 = vst [vmem:[%s293 + $0x50] sm:$0xff] %v2332
        %2466 = vst [vmem:[%s293 + $0x58] sm:$0xff] %v2448
        %2467 = vst [vmem:[%s293 + $0x60] sm:$0xff] %v2335
        %2468 = vst [vmem:[%s293 + $0x68] sm:$0xff] %v2451
        %2469 = vst [vmem:[%s293 + $0x70] sm:$0xff] %v2337
        %2470 = vst [vmem:[%s293 + $0x78] sm:$0xff] %v2453
        %s2471 = sand.u32 %s142, 1
        %s2472 = scalar_lea.sflag [#allocation4], %s2471
        %s2473 = sand.u32 %s142, 1
        %s2474 = smul.addr %s2473, 128
        %s2475 = scalar_lea.vmem [#allocation10], %s2474
        // Predicated region
        $region57: #{tpu_custom_call.1} parent=39 // pred_check
          %p2476 = pneg %p152
        $region58: #{tpu_custom_call.1} parent=39 // pred_check_branch
          %2478 = sbr.rel (%p2476) target = $region60
        $region59: #{tpu_custom_call.1} parent=39 // pred_region
          %s2479 = smul.u32 8, %s24
          %2481 = vsyncadd %s2472, 0
          %s2482 = smul.addr %s2479, 2
          %s2483 = smul.addr %s2482, 8
          %s2484 = scalar_lea.hbm %s5, %s2483
          %s2485 = sshll.u32 %s2475, 4
          %s2486 = int_to_ptr.vmem [resolvable:$true] %s2485
          %s2487 = sshll.u32 %s2484, 4
          %s2488 = int_to_ptr.hbm [resolvable:$true] %s2487
          %2493 = dma.vmem_to_hbm [thread:$0]  %s2486, 2048, %s2488, %s2472, 256, 256, 16
        $region60: #{tpu_custom_call.1} parent=39 // pred_fallthru
          _
      $region40: #{tpu_custom_call.1} parent=5 // pred_fallthru
        _
      %p2494 = scmp.le.s32.totalorder 2, %s19
      // Predicated region
      $region61: #{tpu_custom_call.1} parent=5 // pred_check
        %p2495 = pneg %p2494
      $region62: #{tpu_custom_call.1} parent=5 // pred_check_branch
        %2497 = sbr.rel (%p2495) target = $region64
      $region63: #{tpu_custom_call.1} parent=5 // pred_region
        %s2498 = ssub.s32 %s19, 2
        // Predicated region
        $region65: #{tpu_custom_call.1} parent=63 // pred_check
          %p2499 = pneg %p158
        $region66: #{tpu_custom_call.1} parent=63 // pred_check_branch
          %2501 = sbr.rel (%p2499) target = $region68
        $region67: #{tpu_custom_call.1} parent=63 // pred_region
          %s2502 = sand.u32 %s143, 1
          %s2503 = scalar_lea.sflag [#allocation4], %s2502
          %s2504 = sand.u32 %s143, 1
          %s2505 = smul.addr %s2504, 128
          %s2506 = scalar_lea.vmem [#allocation10], %s2505
          %2508 = dma.done %s2503, 2048
        $region68: #{tpu_custom_call.1} parent=63 // pred_fallthru
          _
      $region64: #{tpu_custom_call.1} parent=5 // pred_fallthru
        _
    $region6: #{tpu_custom_call.1} parent=1 // loop_footer
      %s23 = sadd.s32 1, %s19
    $region7: #{tpu_custom_call.1} parent=1 // loop_footer_branch
      %18 = sbr.rel target = $region3
    $region8: #{tpu_custom_call.1} parent=1 // loop_exit
      _
    %2509 = vsyncpa [#allocation3], 1
    %s2510 = scalar_lea.sflag [#allocation3], 1
    %2511 = vsyncpa %s2510, 1
    %2512 = vsyncpa [#allocation6], 1
    %2513 = vsyncpa [#allocation9], 1
    %2514 = vsyncpa [#allocation4], 1
    %s2515 = scalar_lea.sflag [#allocation4], 1
    %2516 = vsyncpa %s2515, 1

</llo_original>
